<compile_context>
chip_gen: v7x
topology: tpu7x:2x2x1
jax: 0.10.0
libtpu: 0.0.40
codegen_flags: <defaults>
</compile_context>

<pallas_src>
import functools
import math

import jax
import jax.numpy as jnp
from jax import lax
from jax.experimental import pallas as pl
from jax.experimental.pallas import tpu as pltpu


# ----------------------------------------------------------------------------
# Generation-aware VMEM budgeting
# ----------------------------------------------------------------------------
def _vmem_capacity_bytes():
    """Per-TensorCore VMEM capacity; conservative (v7x) fallback if the query is unavailable."""
    try:
        cap = int(pltpu.get_tpu_info().vmem_capacity_bytes)
        if cap > 0:
            return cap
    except Exception:
        pass
    return 64 * 1024 * 1024


# ----------------------------------------------------------------------------
# Pallas kernels
# ----------------------------------------------------------------------------
def _flash_attn_kernel(q_ref, k_ref, v_ref, o_ref, m_ref, l_ref, acc_ref,
                       *, kv_valid, kv_block, kv_padded):
    """Online-softmax flash attention; grid = (B, head-groups, q-blocks, kv-blocks)."""
    ki = pl.program_id(3)

    @pl.when(ki == 0)
    def _():
        m_ref[...] = jnp.full_like(m_ref, -jnp.inf)
        l_ref[...] = jnp.zeros_like(l_ref)
        acc_ref[...] = jnp.zeros_like(acc_ref)

    q = q_ref[...]                              # (G, TQ, Hd), already scaled, compute dtype (bf16)
    k = k_ref[...]                              # (G, TK, Hd)
    v = v_ref[...]                              # (G, TK, Hd)

    # scores = q @ k^T, contracting head_dim directly (no explicit transpose), f32 accumulation.
    s = lax.dot_general(q, k, (((2,), (2,)), ((0,), (0,))),
                        preferred_element_type=jnp.float32)       # (G, TQ, TK)

    if kv_padded:   # static: zero-padded kv tail must not contribute exp(0) to the denominator
        col = ki * kv_block + lax.broadcasted_iota(jnp.int32, s.shape, 2)
        s = jnp.where(col < kv_valid, s, -jnp.inf)

    # Online softmax update (statistics kept in f32 VMEM scratch).
    m_prev = m_ref[...]
    m_new = jnp.maximum(m_prev, jnp.max(s, axis=-1, keepdims=True))
    alpha = jnp.exp(m_prev - m_new)
    p = jnp.exp(s - m_new)

    l_ref[...] = alpha * l_ref[...] + jnp.sum(p, axis=-1, keepdims=True)
    acc_ref[...] = alpha * acc_ref[...] + lax.dot_general(
        p.astype(v.dtype), v, (((2,), (1,)), ((0,), (0,))),
        preferred_element_type=jnp.float32)
    m_ref[...] = m_new

    @pl.when(ki == pl.num_programs(3) - 1)
    def _():
        o_ref[...] = (acc_ref[...] *
                      pl.reciprocal(l_ref[...], approx=True)).astype(o_ref.dtype)


def _attn_onepass_kernel(q_ref, k_ref, v_ref, o_ref, *, kv_valid, kv_block):
    """Single-kv-block specialization: one-pass softmax, no scratch, no rescale bookkeeping."""
    q = q_ref[...]                              # (G, TQ, Hd), already scaled
    k = k_ref[...]                              # (G, KV, Hd)
    v = v_ref[...]

    s = lax.dot_general(q, k, (((2,), (2,)), ((0,), (0,))),
                        preferred_element_type=jnp.float32)       # (G, TQ, KV)

    if kv_valid < kv_block:   # static: mask the zero-padded kv tail
        col = lax.broadcasted_iota(jnp.int32, s.shape, 2)
        s = jnp.where(col < kv_valid, s, -jnp.inf)

    m = jnp.max(s, axis=-1, keepdims=True)
    p = jnp.exp(s - m)
    l = jnp.sum(p, axis=-1, keepdims=True)
    o = lax.dot_general(p.astype(v.dtype), v, (((2,), (1,)), ((0,), (0,))),
                        preferred_element_type=jnp.float32)
    o_ref[...] = (o * pl.reciprocal(l, approx=True)).astype(o_ref.dtype)


# ----------------------------------------------------------------------------
# Tiling / sizing helpers
# ----------------------------------------------------------------------------
def _pick_tile(n, max_single=512):
    """Return (tile, padded_n). Single full block when it fits; otherwise the largest of
    (512, 256, 128) whose zero-pad waste is <= 25% of n (minimum-pad fallback)."""
    if n <= max_single:
        return n, n
    best = None
    for t in (512, 256, 128):
        padded = -(-n // t) * t
        if padded - n <= n // 4:
            return t, padded
        if best is None or padded < best[1]:
            best = (t, padded)
    return best


def _pick_head_group(num_heads, tq, tk, hd, in_item, out_item, budget_bytes):
    """Largest divisor of num_heads whose double-buffered blocks + f32 scratch fit the budget."""
    for g in range(num_heads, 0, -1):
        if num_heads % g:
            continue
        blocks = 2 * g * hd * (tq * in_item + 2 * tk * in_item + tq * out_item)
        scratch = 4 * g * tq * (hd + 2)           # f32 m, l, acc
        if blocks + scratch <= budget_bytes:
            return g
    return 1


# ----------------------------------------------------------------------------
# Flash attention entry point (shared by TitanAttention and NeuralMemory.retrieve)
# ----------------------------------------------------------------------------
def flash_attention(q, k, v, *, scale=None, compute_dtype=jnp.bfloat16):
    """Unmasked multi-head attention.  q: (B, H, Sq, Hd); k, v: (B, H, Skv, Hd) -> (B, H, Sq, Hd)."""
    B, H, Sq, Hd = q.shape
    _, _, Skv, _ = k.shape
    out_dtype = q.dtype
    if scale is None:
        scale = 1.0 / math.sqrt(Hd)

    # Fold the softmax scale into q and cast MXU operands to bf16 (fuses into one XLA convert);
    # in-kernel accumulation stays f32 via preferred_element_type.
    cd = compute_dtype if compute_dtype is not None else q.dtype
    q = (q * scale).astype(cd)
    k = k.astype(cd)
    v = v.astype(cd)

    tq, sq_pad = _pick_tile(Sq)
    tk, skv_pad = _pick_tile(Skv)
    nq, nk = sq_pad // tq, skv_pad // tk

    # v7x has 2 TensorCores sharded over the parallel grid axes: make sure a single-batch,
    # single-head retrieve still has >=2 blocks on a parallel axis (cheap on 1-TC chips).
    if B == 1 and H == 1 and nq == 1 and Sq >= 256:
        half = -(-Sq // 2)
        tq = -(-half // 8) * 8                 # sublane-aligned half tile
        sq_pad, nq = 2 * tq, 2

    if sq_pad != Sq:
        q = jnp.pad(q, ((0, 0), (0, 0), (0, sq_pad - Sq), (0, 0)))
    if skv_pad != Skv:
        k = jnp.pad(k, ((0, 0), (0, 0), (0, skv_pad - Skv), (0, 0)))
        v = jnp.pad(v, ((0, 0), (0, 0), (0, skv_pad - Skv), (0, 0)))
    kv_padded = skv_pad != Skv

    in_item = jnp.dtype(cd).itemsize
    out_item = jnp.dtype(out_dtype).itemsize

    cap = _vmem_capacity_bytes()
    hg_budget = max(8 << 20, cap // 4)          # ~16 MiB on v7x, ~32 MiB on v5e/v6e
    g = _pick_head_group(H, tq, tk, Hd, in_item, out_item, hg_budget)
    ng = H // g

    block_bytes = 2 * g * Hd * (tq * in_item + 2 * tk * in_item + tq * out_item)
    scratch_bytes = 4 * g * tq * (Hd + 2)
    vmem_cap = int(cap * 0.72)                  # leave headroom for Mosaic internal scratch
    vmem_limit = int(min(vmem_cap, max(32 << 20, 2 * (block_bytes + scratch_bytes))))

    cost = pl.CostEstimate(
        flops=int(4 * B * H * sq_pad * skv_pad * Hd),            # QK^T + PV
        transcendentals=int(B * H * sq_pad * skv_pad),           # exp
        bytes_accessed=int(in_item * (q.size + k.size + v.size) +
                           out_item * B * H * sq_pad * Hd),
    )

    if nk == 1:
        # Whole K/V fits one VMEM tile: one-pass softmax, no reduction grid axis, no scratch.
        kernel = functools.partial(_attn_onepass_kernel, kv_valid=Skv, kv_block=tk)
        q_spec = pl.BlockSpec((None, g, tq, Hd), lambda b, h, qi: (b, h, qi, 0))
        kv_spec = pl.BlockSpec((None, g, tk, Hd), lambda b, h, qi: (b, h, 0, 0))
        o_spec = pl.BlockSpec((None, g, tq, Hd), lambda b, h, qi: (b, h, qi, 0))
        out = pl.pallas_call(
            kernel,
            out_shape=jax.ShapeDtypeStruct((B, H, sq_pad, Hd), out_dtype),
            grid_spec=pltpu.PrefetchScalarGridSpec(
                num_scalar_prefetch=0,
                grid=(B, ng, nq),
                in_specs=[q_spec, kv_spec, kv_spec],
                out_specs=o_spec,
            ),
            compiler_params=pltpu.CompilerParams(
                dimension_semantics=("parallel", "parallel", "parallel"),
                vmem_limit_bytes=vmem_limit,
            ),
            cost_estimate=cost,
        )(q, k, v)
    else:
        kernel = functools.partial(_flash_attn_kernel, kv_valid=Skv, kv_block=tk,
                                   kv_padded=kv_padded)
        q_spec = pl.BlockSpec((None, g, tq, Hd), lambda b, h, qi, ki: (b, h, qi, 0))
        kv_spec = pl.BlockSpec((None, g, tk, Hd), lambda b, h, qi, ki: (b, h, ki, 0))
        o_spec = pl.BlockSpec((None, g, tq, Hd), lambda b, h, qi, ki: (b, h, qi, 0))
        out = pl.pallas_call(
            kernel,
            out_shape=jax.ShapeDtypeStruct((B, H, sq_pad, Hd), out_dtype),
            grid_spec=pltpu.PrefetchScalarGridSpec(
                num_scalar_prefetch=0,
                grid=(B, ng, nq, nk),                        # kv (reduction) axis last
                in_specs=[q_spec, kv_spec, kv_spec],
                out_specs=o_spec,
                scratch_shapes=[
                    pltpu.VMEM((g, tq, 1), jnp.float32),     # running max
                    pltpu.VMEM((g, tq, 1), jnp.float32),     # running denominator
                    pltpu.VMEM((g, tq, Hd), jnp.float32),    # output accumulator
                ],
            ),
            compiler_params=pltpu.CompilerParams(
                dimension_semantics=("parallel", "parallel", "parallel", "arbitrary"),
                vmem_limit_bytes=vmem_limit,
            ),
            cost_estimate=cost,
        )(q, k, v)

    if sq_pad != Sq:
        out = out[:, :, :Sq, :]
    return out


# ----------------------------------------------------------------------------
# JAX glue modules mirroring the PyTorch forward
# ----------------------------------------------------------------------------
class NeuralMemoryJAX:
    def __init__(self, memory_size, dim, key):
        self.memory_size = memory_size
        self.dim = dim
        ks = jax.random.split(key, 6)
        s = 1.0 / math.sqrt(dim)
        self.Wk = jax.random.normal(ks[0], (dim, dim), jnp.float32) * s
        self.Wv = jax.random.normal(ks[1], (dim, dim), jnp.float32) * s
        self.Wq = jax.random.normal(ks[2], (dim, dim), jnp.float32) * s
        self.bk = jax.random.normal(ks[3], (dim,), jnp.float32) * s
        self.bv = jax.random.normal(ks[4], (dim,), jnp.float32) * s
        self.bq = jax.random.normal(ks[5], (dim,), jnp.float32) * s

    def init_state(self, batch_size):
        return jnp.zeros((batch_size, self.memory_size, self.dim), jnp.float32)

    def retrieve(self, memory_state, query, *, use_pallas=True):
        q = query @ self.Wq + self.bq            # (B, Lq, D)
        k = memory_state @ self.Wk + self.bk     # (B, M, D)
        v = memory_state @ self.Wv + self.bv     # (B, M, D)
        scale = 1.0 / math.sqrt(self.dim)
        if use_pallas:
            # Single-head attention with head_dim == dim: add a size-1 head axis (free reshape).
            return flash_attention(q[:, None], k[:, None], v[:, None], scale=scale)[:, 0]
        s = jnp.einsum("bqd,bkd->bqk", q, k) * scale
        p = jax.nn.softmax(s, axis=-1)
        return jnp.einsum("bqk,bkd->bqd", p, v)

    def update(self, memory_state, input_data):
        return 0.9 * memory_state + 0.1 * input_data


class TitanAttentionJAX:
    # TODO(synk): TitanAttention source not provided; assumed standard multi-head SDPA
    #             (q/k/v/out projections, 1/sqrt(head_dim), no mask, eval-mode dropout = identity).
    def __init__(self, dim, num_heads, head_dim, key):
        self.num_heads, self.head_dim = num_heads, head_dim
        inner = num_heads * head_dim
        ks = jax.random.split(key, 8)
        si, so = 1.0 / math.sqrt(dim), 1.0 / math.sqrt(inner)
        self.Wq = jax.random.normal(ks[0], (dim, inner), jnp.float32) * si
        self.Wk = jax.random.normal(ks[1], (dim, inner), jnp.float32) * si
        self.Wv = jax.random.normal(ks[2], (dim, inner), jnp.float32) * si
        self.Wo = jax.random.normal(ks[3], (inner, dim), jnp.float32) * so
        self.bq = jax.random.normal(ks[4], (inner,), jnp.float32) * si
        self.bk = jax.random.normal(ks[5], (inner,), jnp.float32) * si
        self.bv = jax.random.normal(ks[6], (inner,), jnp.float32) * si
        self.bo = jax.random.normal(ks[7], (dim,), jnp.float32) * so

    def __call__(self, x, *, use_pallas=True):
        B, L, _ = x.shape
        H, Hd = self.num_heads, self.head_dim

        def heads(t):   # (B, L, H*Hd) -> (B, H, L, Hd); fused with the projection by XLA.
            return t.reshape(B, L, H, Hd).transpose(0, 2, 1, 3)

        q = heads(x @ self.Wq + self.bq)
        k = heads(x @ self.Wk + self.bk)
        v = heads(x @ self.Wv + self.bv)
        scale = 1.0 / math.sqrt(Hd)
        if use_pallas:
            o = flash_attention(q, k, v, scale=scale)
        else:
            s = jnp.einsum("bhqd,bhkd->bhqk", q, k) * scale
            p = jax.nn.softmax(s, axis=-1)
            o = jnp.einsum("bhqk,bhkd->bhqd", p, v)
        o = o.transpose(0, 2, 1, 3).reshape(B, L, H * Hd)
        return o @ self.Wo + self.bo


class MemoryAsContextTitanJAX:
    def __init__(self, dim, num_heads=8, head_dim=64, chunk_size=256,
                 num_persistent_memory=32, memory_size=1024, key=None):
        ks = jax.random.split(key, 6)
        self.dim = dim
        self.chunk_size = chunk_size
        self.num_persistent_memory = num_persistent_memory
        self.persistent_memory = jax.random.normal(
            ks[0], (num_persistent_memory, dim), jnp.float32)
        s = 1.0 / math.sqrt(dim)
        self.Wq = jax.random.normal(ks[1], (dim, dim), jnp.float32) * s   # query_proj
        self.bq = jax.random.normal(ks[2], (dim,), jnp.float32) * s
        # output_proj exists in the PyTorch module but is never used by forward(); kept for fidelity.
        self.Wout = jax.random.normal(ks[3], (dim, dim), jnp.float32) * s
        self.bout = jnp.zeros((dim,), jnp.float32)
        self.memory = NeuralMemoryJAX(memory_size, dim, ks[4])
        self.attention = TitanAttentionJAX(dim, num_heads, head_dim, ks[5])

    def __call__(self, x, *, use_pallas=True):
        B, S, D = x.shape
        C, P = self.chunk_size, self.num_persistent_memory
        assert S % C == 0, "demo driver assumes full chunks"
        # The PyTorch update `0.9*mem + 0.1*attended` only broadcasts if these match.
        assert self.memory.memory_size == P + 2 * C

        num_chunks = S // C
        chunks = x.reshape(B, num_chunks, C, D).transpose(1, 0, 2, 3)   # (N, B, C, D)

        def step(memory_state, chunk):
            query = chunk @ self.Wq + self.bq
            historical = self.memory.retrieve(memory_state, query, use_pallas=use_pallas)
            persistent = jnp.broadcast_to(self.persistent_memory[None], (B, P, D))
            combined = jnp.concatenate([persistent, historical, chunk], axis=1)
            attended = self.attention(combined, use_pallas=use_pallas)
            new_state = self.memory.update(memory_state, attended)
            memory_output = self.memory.retrieve(new_state, attended, use_pallas=use_pallas)
            output = attended * memory_output
            return new_state, output[:, -C:]

        # Serial chunk recurrence as lax.scan (static chunk count) instead of Python unrolling.
        _, outs = lax.scan(step, self.memory.init_state(B), chunks)     # (N, B, C, D)
        return outs.transpose(1, 0, 2, 3).reshape(B, S, D)


if __name__ == "__main__":
    key = jax.random.PRNGKey(0)
    kp, kx = jax.random.split(key)

    # Small shapes consistent with the module; memory_size == P + 2*chunk_size so the
    # reference memory update broadcasts (as the PyTorch module implicitly requires).
    batch, seq_len, dim = 2, 16, 32
    num_heads, head_dim = 4, 8
    chunk_size, num_persistent, memory_size = 8, 8, 24

    mod = MemoryAsContextTitanJAX(
        dim, num_heads=num_heads, head_dim=head_dim, chunk_size=chunk_size,
        num_persistent_memory=num_persistent, memory_size=memory_size, key=kp)

    x = jax.random.normal(kx, (batch, seq_len, dim), jnp.float32)

    fwd_pallas = jax.jit(lambda xx: mod(xx, use_pallas=True))
    fwd_dense = jax.jit(lambda xx: mod(xx, use_pallas=False))
    out = jax.block_until_ready(fwd_pallas(x))
    ref = jax.block_until_ready(fwd_dense(x))
    assert out.shape == (batch, seq_len, dim)
    # Tolerance covers the bf16 MXU operands + online-softmax reassociation + approx reciprocal
    # accumulated through the two chained attention calls and the elementwise product.
    err = float(jnp.max(jnp.abs(out - ref)))
    assert jnp.allclose(out, ref, atol=7.5e-2, rtol=7.5e-2), \
        "module mismatch vs f32 dense reference, max abs err = %g" % err

    # Kernel-level check at a realistic MAC combined length (544 = 32 + 2*256): exercises the
    # pad-to-128 tiling, the kv-tail mask and the multi-block online-softmax path.
    kq, kk, kvv = jax.random.split(jax.random.PRNGKey(1), 3)
    Bu, Hu, Su, Du = 1, 2, 544, 64
    qu = jax.random.normal(kq, (Bu, Hu, Su, Du), jnp.float32)
    ku = jax.random.normal(kk, (Bu, Hu, Su, Du), jnp.float32)
    vu = jax.random.normal(kvv, (Bu, Hu, Su, Du), jnp.float32)
    ou = jax.block_until_ready(flash_attention(qu, ku, vu))
    # bf16-matched dense reference (same MXU operand precision as the kernel, f32 accumulation).
    qb = qu.astype(jnp.bfloat16).astype(jnp.float32)
    kb = ku.astype(jnp.bfloat16).astype(jnp.float32)
    vb = vu.astype(jnp.bfloat16).astype(jnp.float32)
    su = jnp.einsum("bhqd,bhkd->bhqk", qb, kb) / math.sqrt(Du)
    refu = jnp.einsum("bhqk,bhkd->bhqd", jax.nn.softmax(su, axis=-1), vb)
    erru = float(jnp.max(jnp.abs(ou - refu)))
    assert ou.shape == (Bu, Hu, Su, Du)
    assert jnp.allclose(ou, refu, atol=2e-2, rtol=2e-2), \
        "flash kernel mismatch vs bf16-matched dense reference, max abs err = %g" % erru

    print("KERNEL_OK")
</pallas_src>

<mosaic_0001>
module attributes {stable_mosaic.version = 11 : i64} {
  func.func @_attn_onepass_kernel(%arg0: i32, %arg1: i32, %arg2: i32, %arg3: memref<1x1x8x32xbf16, #tpu.memory_space<vmem>>, %arg4: memref<1x1x24x32xbf16, #tpu.memory_space<vmem>>, %arg5: memref<1x1x24x32xbf16, #tpu.memory_space<vmem>>, %arg6: memref<1x1x8x32xf32, #tpu.memory_space<vmem>>) attributes {dimension_semantics = [#tpu.dimension_semantics<parallel>, #tpu.dimension_semantics<parallel>, #tpu.dimension_semantics<parallel>], iteration_bounds = array<i64: 2, 1, 1>, scalar_prefetch = 0 : i64, scratch_operands = 0 : i64, tpu.core_type = #tpu.core_type<tc>, window_params = [{transform_indices = @transform_0, window_bounds = array<i64: 1, 1, 8, 32>}, {transform_indices = @transform_1, window_bounds = array<i64: 1, 1, 24, 32>}, {transform_indices = @transform_2, window_bounds = array<i64: 1, 1, 24, 32>}, {transform_indices = @transform_3, window_bounds = array<i64: 1, 1, 8, 32>}]} {
    %c0 = arith.constant 0 : index
    %c0_0 = arith.constant 0 : index
    %c0_1 = arith.constant 0 : index
    %c0_2 = arith.constant 0 : index
    %0 = vector.load %arg3[%c0, %c0_0, %c0_1, %c0_2] : memref<1x1x8x32xbf16, #tpu.memory_space<vmem>>, vector<1x1x8x32xbf16>
    %1 = vector.shape_cast %0 : vector<1x1x8x32xbf16> to vector<1x8x32xbf16>
    %c0_3 = arith.constant 0 : index
    %c0_4 = arith.constant 0 : index
    %c0_5 = arith.constant 0 : index
    %c0_6 = arith.constant 0 : index
    %2 = vector.load %arg4[%c0_3, %c0_4, %c0_5, %c0_6] : memref<1x1x24x32xbf16, #tpu.memory_space<vmem>>, vector<1x1x24x32xbf16>
    %3 = vector.shape_cast %2 : vector<1x1x24x32xbf16> to vector<1x24x32xbf16>
    %c0_7 = arith.constant 0 : index
    %c0_8 = arith.constant 0 : index
    %c0_9 = arith.constant 0 : index
    %c0_10 = arith.constant 0 : index
    %4 = vector.load %arg5[%c0_7, %c0_8, %c0_9, %c0_10] : memref<1x1x24x32xbf16, #tpu.memory_space<vmem>>, vector<1x1x24x32xbf16>
    %5 = vector.shape_cast %4 : vector<1x1x24x32xbf16> to vector<1x24x32xbf16>
    %cst = arith.constant dense<0.000000e+00> : vector<1x8x24xf32>
    %6 = tpu.matmul %1, %3, %cst {dimension_numbers = #tpu.dot_dimension_numbers<[2], [2], [1], [1], [0, 0, 0, 1, 1, 1], [0], [0]>} : vector<1x8x32xbf16>, vector<1x24x32xbf16>, vector<1x8x24xf32> -> vector<1x8x24xf32>
    %cst_11 = arith.constant dense<0xFF800000> : vector<1x8xf32>
    %7 = vector.multi_reduction <maximumf>, %6, %cst_11 [2] : vector<1x8x24xf32> to vector<1x8xf32>
    %8 = vector.shape_cast %7 : vector<1x8xf32> to vector<1x8x1xf32>
    %9 = vector.broadcast %8 : vector<1x8x1xf32> to vector<1x8x24xf32>
    %10 = arith.subf %6, %9 : vector<1x8x24xf32>
    %11 = math.exp %10 : vector<1x8x24xf32>
    %cst_12 = arith.constant dense<0.000000e+00> : vector<1x8xf32>
    %12 = vector.multi_reduction <add>, %11, %cst_12 [2] : vector<1x8x24xf32> to vector<1x8xf32>
    %13 = vector.shape_cast %12 : vector<1x8xf32> to vector<1x8x1xf32>
    %14 = arith.truncf %11 : vector<1x8x24xf32> to vector<1x8x24xbf16>
    %cst_13 = arith.constant dense<0.000000e+00> : vector<1x8x32xf32>
    %15 = tpu.matmul %14, %5, %cst_13 {dimension_numbers = #tpu.dot_dimension_numbers<[2], [1], [1], [2], [0, 0, 0, 1, 1, 2], [0], [0]>} : vector<1x8x24xbf16>, vector<1x24x32xbf16>, vector<1x8x32xf32> -> vector<1x8x32xf32>
    %16 = tpu.reciprocal %13 {approx = true} : vector<1x8x1xf32> -> vector<1x8x1xf32>
    %17 = vector.broadcast %16 : vector<1x8x1xf32> to vector<1x8x32xf32>
    %18 = arith.mulf %15, %17 : vector<1x8x32xf32>
    %c0_14 = arith.constant 0 : index
    %c0_15 = arith.constant 0 : index
    %c0_16 = arith.constant 0 : index
    %c0_17 = arith.constant 0 : index
    %19 = vector.load %arg6[%c0_14, %c0_15, %c0_16, %c0_17] : memref<1x1x8x32xf32, #tpu.memory_space<vmem>>, vector<1x1x8x32xf32>
    %20 = vector.shape_cast %19 : vector<1x1x8x32xf32> to vector<1x8x32xf32>
    %21 = vector.shape_cast %18 : vector<1x8x32xf32> to vector<1x1x8x32xf32>
    tpu.vector_store %arg6[%c0_14, %c0_15, %c0_16, %c0_17], %21 {strides = array<i32>} : memref<1x1x8x32xf32, #tpu.memory_space<vmem>>, vector<1x1x8x32xf32>,
    return
  }
  func.func @transform_0(%arg0: i32, %arg1: i32, %arg2: i32) -> (i32, i32, i32, i32) {
    %c0_i32 = arith.constant 0 : i32
    %c0_i32_0 = arith.constant 0 : i32
    return %arg0, %arg1, %arg2, %c0_i32 : i32, i32, i32, i32
  }
  func.func @transform_1(%arg0: i32, %arg1: i32, %arg2: i32) -> (i32, i32, i32, i32) {
    %c0_i32 = arith.constant 0 : i32
    %c0_i32_0 = arith.constant 0 : i32
    %c0_i32_1 = arith.constant 0 : i32
    return %arg0, %arg1, %c0_i32, %c0_i32_0 : i32, i32, i32, i32
  }
  func.func @transform_2(%arg0: i32, %arg1: i32, %arg2: i32) -> (i32, i32, i32, i32) {
    %c0_i32 = arith.constant 0 : i32
    %c0_i32_0 = arith.constant 0 : i32
    %c0_i32_1 = arith.constant 0 : i32
    return %arg0, %arg1, %c0_i32, %c0_i32_0 : i32, i32, i32, i32
  }
  func.func @transform_3(%arg0: i32, %arg1: i32, %arg2: i32) -> (i32, i32, i32, i32) {
    %c0_i32 = arith.constant 0 : i32
    %c0_i32_0 = arith.constant 0 : i32
    return %arg0, %arg1, %arg2, %c0_i32 : i32, i32, i32, i32
  }
}

module attributes {stable_mosaic.version = 11 : i64} {
  func.func @_attn_onepass_kernel(%arg0: i32, %arg1: i32, %arg2: i32, %arg3: memref<1x4x24x8xbf16, #tpu.memory_space<vmem>>, %arg4: memref<1x4x24x8xbf16, #tpu.memory_space<vmem>>, %arg5: memref<1x4x24x8xbf16, #tpu.memory_space<vmem>>, %arg6: memref<1x4x24x8xf32, #tpu.memory_space<vmem>>) attributes {dimension_semantics = [#tpu.dimension_semantics<parallel>, #tpu.dimension_semantics<parallel>, #tpu.dimension_semantics<parallel>], iteration_bounds = array<i64: 2, 1, 1>, scalar_prefetch = 0 : i64, scratch_operands = 0 : i64, tpu.core_type = #tpu.core_type<tc>, window_params = [{transform_indices = @transform_0, window_bounds = array<i64: 1, 4, 24, 8>}, {transform_indices = @transform_1, window_bounds = array<i64: 1, 4, 24, 8>}, {transform_indices = @transform_2, window_bounds = array<i64: 1, 4, 24, 8>}, {transform_indices = @transform_3, window_bounds = array<i64: 1, 4, 24, 8>}]} {
    %c0 = arith.constant 0 : index
    %c0_0 = arith.constant 0 : index
    %c0_1 = arith.constant 0 : index
    %c0_2 = arith.constant 0 : index
    %0 = vector.load %arg3[%c0, %c0_0, %c0_1, %c0_2] : memref<1x4x24x8xbf16, #tpu.memory_space<vmem>>, vector<1x4x24x8xbf16>
    %1 = vector.shape_cast %0 : vector<1x4x24x8xbf16> to vector<4x24x8xbf16>
    %c0_3 = arith.constant 0 : index
    %c0_4 = arith.constant 0 : index
    %c0_5 = arith.constant 0 : index
    %c0_6 = arith.constant 0 : index
    %2 = vector.load %arg4[%c0_3, %c0_4, %c0_5, %c0_6] : memref<1x4x24x8xbf16, #tpu.memory_space<vmem>>, vector<1x4x24x8xbf16>
    %3 = vector.shape_cast %2 : vector<1x4x24x8xbf16> to vector<4x24x8xbf16>
    %c0_7 = arith.constant 0 : index
    %c0_8 = arith.constant 0 : index
    %c0_9 = arith.constant 0 : index
    %c0_10 = arith.constant 0 : index
    %4 = vector.load %arg5[%c0_7, %c0_8, %c0_9, %c0_10] : memref<1x4x24x8xbf16, #tpu.memory_space<vmem>>, vector<1x4x24x8xbf16>
    %5 = vector.shape_cast %4 : vector<1x4x24x8xbf16> to vector<4x24x8xbf16>
    %cst = arith.constant dense<0.000000e+00> : vector<4x24x24xf32>
    %6 = tpu.matmul %1, %3, %cst {dimension_numbers = #tpu.dot_dimension_numbers<[2], [2], [1], [1], [0, 0, 0, 1, 1, 1], [0], [0]>} : vector<4x24x8xbf16>, vector<4x24x8xbf16>, vector<4x24x24xf32> -> vector<4x24x24xf32>
    %cst_11 = arith.constant dense<0xFF800000> : vector<4x24xf32>
    %7 = vector.multi_reduction <maximumf>, %6, %cst_11 [2] : vector<4x24x24xf32> to vector<4x24xf32>
    %8 = vector.shape_cast %7 : vector<4x24xf32> to vector<4x24x1xf32>
    %9 = vector.broadcast %8 : vector<4x24x1xf32> to vector<4x24x24xf32>
    %10 = arith.subf %6, %9 : vector<4x24x24xf32>
    %11 = math.exp %10 : vector<4x24x24xf32>
    %cst_12 = arith.constant dense<0.000000e+00> : vector<4x24xf32>
    %12 = vector.multi_reduction <add>, %11, %cst_12 [2] : vector<4x24x24xf32> to vector<4x24xf32>
    %13 = vector.shape_cast %12 : vector<4x24xf32> to vector<4x24x1xf32>
    %14 = arith.truncf %11 : vector<4x24x24xf32> to vector<4x24x24xbf16>
    %cst_13 = arith.constant dense<0.000000e+00> : vector<4x24x8xf32>
    %15 = tpu.matmul %14, %5, %cst_13 {dimension_numbers = #tpu.dot_dimension_numbers<[2], [1], [1], [2], [0, 0, 0, 1, 1, 2], [0], [0]>} : vector<4x24x24xbf16>, vector<4x24x8xbf16>, vector<4x24x8xf32> -> vector<4x24x8xf32>
    %16 = tpu.reciprocal %13 {approx = true} : vector<4x24x1xf32> -> vector<4x24x1xf32>
    %17 = vector.broadcast %16 : vector<4x24x1xf32> to vector<4x24x8xf32>
    %18 = arith.mulf %15, %17 : vector<4x24x8xf32>
    %c0_14 = arith.constant 0 : index
    %c0_15 = arith.constant 0 : index
    %c0_16 = arith.constant 0 : index
    %c0_17 = arith.constant 0 : index
    %19 = vector.load %arg6[%c0_14, %c0_15, %c0_16, %c0_17] : memref<1x4x24x8xf32, #tpu.memory_space<vmem>>, vector<1x4x24x8xf32>
    %20 = vector.shape_cast %19 : vector<1x4x24x8xf32> to vector<4x24x8xf32>
    %21 = vector.shape_cast %18 : vector<4x24x8xf32> to vector<1x4x24x8xf32>
    tpu.vector_store %arg6[%c0_14, %c0_15, %c0_16, %c0_17], %21 {strides = array<i32>} : memref<1x4x24x8xf32, #tpu.memory_space<vmem>>, vector<1x4x24x8xf32>,
    return
  }
  func.func @transform_0(%arg0: i32, %arg1: i32, %arg2: i32) -> (i32, i32, i32, i32) {
    %c0_i32 = arith.constant 0 : i32
    %c0_i32_0 = arith.constant 0 : i32
    return %arg0, %arg1, %arg2, %c0_i32 : i32, i32, i32, i32
  }
  func.func @transform_1(%arg0: i32, %arg1: i32, %arg2: i32) -> (i32, i32, i32, i32) {
    %c0_i32 = arith.constant 0 : i32
    %c0_i32_0 = arith.constant 0 : i32
    %c0_i32_1 = arith.constant 0 : i32
    return %arg0, %arg1, %c0_i32, %c0_i32_0 : i32, i32, i32, i32
  }
  func.func @transform_2(%arg0: i32, %arg1: i32, %arg2: i32) -> (i32, i32, i32, i32) {
    %c0_i32 = arith.constant 0 : i32
    %c0_i32_0 = arith.constant 0 : i32
    %c0_i32_1 = arith.constant 0 : i32
    return %arg0, %arg1, %c0_i32, %c0_i32_0 : i32, i32, i32, i32
  }
  func.func @transform_3(%arg0: i32, %arg1: i32, %arg2: i32) -> (i32, i32, i32, i32) {
    %c0_i32 = arith.constant 0 : i32
    %c0_i32_0 = arith.constant 0 : i32
    return %arg0, %arg1, %arg2, %c0_i32 : i32, i32, i32, i32
  }
}

module attributes {stable_mosaic.version = 11 : i64} {
  func.func @_attn_onepass_kernel(%arg0: i32, %arg1: i32, %arg2: i32, %arg3: memref<1x1x24x32xbf16, #tpu.memory_space<vmem>>, %arg4: memref<1x1x24x32xbf16, #tpu.memory_space<vmem>>, %arg5: memref<1x1x24x32xbf16, #tpu.memory_space<vmem>>, %arg6: memref<1x1x24x32xf32, #tpu.memory_space<vmem>>) attributes {dimension_semantics = [#tpu.dimension_semantics<parallel>, #tpu.dimension_semantics<parallel>, #tpu.dimension_semantics<parallel>], iteration_bounds = array<i64: 2, 1, 1>, scalar_prefetch = 0 : i64, scratch_operands = 0 : i64, tpu.core_type = #tpu.core_type<tc>, window_params = [{transform_indices = @transform_0, window_bounds = array<i64: 1, 1, 24, 32>}, {transform_indices = @transform_1, window_bounds = array<i64: 1, 1, 24, 32>}, {transform_indices = @transform_2, window_bounds = array<i64: 1, 1, 24, 32>}, {transform_indices = @transform_3, window_bounds = array<i64: 1, 1, 24, 32>}]} {
    %c0 = arith.constant 0 : index
    %c0_0 = arith.constant 0 : index
    %c0_1 = arith.constant 0 : index
    %c0_2 = arith.constant 0 : index
    %0 = vector.load %arg3[%c0, %c0_0, %c0_1, %c0_2] : memref<1x1x24x32xbf16, #tpu.memory_space<vmem>>, vector<1x1x24x32xbf16>
    %1 = vector.shape_cast %0 : vector<1x1x24x32xbf16> to vector<1x24x32xbf16>
    %c0_3 = arith.constant 0 : index
    %c0_4 = arith.constant 0 : index
    %c0_5 = arith.constant 0 : index
    %c0_6 = arith.constant 0 : index
    %2 = vector.load %arg4[%c0_3, %c0_4, %c0_5, %c0_6] : memref<1x1x24x32xbf16, #tpu.memory_space<vmem>>, vector<1x1x24x32xbf16>
    %3 = vector.shape_cast %2 : vector<1x1x24x32xbf16> to vector<1x24x32xbf16>
    %c0_7 = arith.constant 0 : index
    %c0_8 = arith.constant 0 : index
    %c0_9 = arith.constant 0 : index
    %c0_10 = arith.constant 0 : index
    %4 = vector.load %arg5[%c0_7, %c0_8, %c0_9, %c0_10] : memref<1x1x24x32xbf16, #tpu.memory_space<vmem>>, vector<1x1x24x32xbf16>
    %5 = vector.shape_cast %4 : vector<1x1x24x32xbf16> to vector<1x24x32xbf16>
    %cst = arith.constant dense<0.000000e+00> : vector<1x24x24xf32>
    %6 = tpu.matmul %1, %3, %cst {dimension_numbers = #tpu.dot_dimension_numbers<[2], [2], [1], [1], [0, 0, 0, 1, 1, 1], [0], [0]>} : vector<1x24x32xbf16>, vector<1x24x32xbf16>, vector<1x24x24xf32> -> vector<1x24x24xf32>
    %cst_11 = arith.constant dense<0xFF800000> : vector<1x24xf32>
    %7 = vector.multi_reduction <maximumf>, %6, %cst_11 [2] : vector<1x24x24xf32> to vector<1x24xf32>
    %8 = vector.shape_cast %7 : vector<1x24xf32> to vector<1x24x1xf32>
    %9 = vector.broadcast %8 : vector<1x24x1xf32> to vector<1x24x24xf32>
    %10 = arith.subf %6, %9 : vector<1x24x24xf32>
    %11 = math.exp %10 : vector<1x24x24xf32>
    %cst_12 = arith.constant dense<0.000000e+00> : vector<1x24xf32>
    %12 = vector.multi_reduction <add>, %11, %cst_12 [2] : vector<1x24x24xf32> to vector<1x24xf32>
    %13 = vector.shape_cast %12 : vector<1x24xf32> to vector<1x24x1xf32>
    %14 = arith.truncf %11 : vector<1x24x24xf32> to vector<1x24x24xbf16>
    %cst_13 = arith.constant dense<0.000000e+00> : vector<1x24x32xf32>
    %15 = tpu.matmul %14, %5, %cst_13 {dimension_numbers = #tpu.dot_dimension_numbers<[2], [1], [1], [2], [0, 0, 0, 1, 1, 2], [0], [0]>} : vector<1x24x24xbf16>, vector<1x24x32xbf16>, vector<1x24x32xf32> -> vector<1x24x32xf32>
    %16 = tpu.reciprocal %13 {approx = true} : vector<1x24x1xf32> -> vector<1x24x1xf32>
    %17 = vector.broadcast %16 : vector<1x24x1xf32> to vector<1x24x32xf32>
    %18 = arith.mulf %15, %17 : vector<1x24x32xf32>
    %c0_14 = arith.constant 0 : index
    %c0_15 = arith.constant 0 : index
    %c0_16 = arith.constant 0 : index
    %c0_17 = arith.constant 0 : index
    %19 = vector.load %arg6[%c0_14, %c0_15, %c0_16, %c0_17] : memref<1x1x24x32xf32, #tpu.memory_space<vmem>>, vector<1x1x24x32xf32>
    %20 = vector.shape_cast %19 : vector<1x1x24x32xf32> to vector<1x24x32xf32>
    %21 = vector.shape_cast %18 : vector<1x24x32xf32> to vector<1x1x24x32xf32>
    tpu.vector_store %arg6[%c0_14, %c0_15, %c0_16, %c0_17], %21 {strides = array<i32>} : memref<1x1x24x32xf32, #tpu.memory_space<vmem>>, vector<1x1x24x32xf32>,
    return
  }
  func.func @transform_0(%arg0: i32, %arg1: i32, %arg2: i32) -> (i32, i32, i32, i32) {
    %c0_i32 = arith.constant 0 : i32
    %c0_i32_0 = arith.constant 0 : i32
    return %arg0, %arg1, %arg2, %c0_i32 : i32, i32, i32, i32
  }
  func.func @transform_1(%arg0: i32, %arg1: i32, %arg2: i32) -> (i32, i32, i32, i32) {
    %c0_i32 = arith.constant 0 : i32
    %c0_i32_0 = arith.constant 0 : i32
    %c0_i32_1 = arith.constant 0 : i32
    return %arg0, %arg1, %c0_i32, %c0_i32_0 : i32, i32, i32, i32
  }
  func.func @transform_2(%arg0: i32, %arg1: i32, %arg2: i32) -> (i32, i32, i32, i32) {
    %c0_i32 = arith.constant 0 : i32
    %c0_i32_0 = arith.constant 0 : i32
    %c0_i32_1 = arith.constant 0 : i32
    return %arg0, %arg1, %c0_i32, %c0_i32_0 : i32, i32, i32, i32
  }
  func.func @transform_3(%arg0: i32, %arg1: i32, %arg2: i32) -> (i32, i32, i32, i32) {
    %c0_i32 = arith.constant 0 : i32
    %c0_i32_0 = arith.constant 0 : i32
    return %arg0, %arg1, %arg2, %c0_i32 : i32, i32, i32, i32
  }
}

</mosaic_0001>

<llo_original>
// kernel: custom-call.1
$region0: #{custom-call.1}
  %s0 = inlined_call_operand.vmem [shape: f32[2,2,8,32], index: 0, kind: output, shape index: {}]

// kernel: custom-call
$region0: #{custom-call}
  %s0 = inlined_call_operand.vmem [shape: f32[2,24,32], index: 0, kind: output, shape index: {}]

// kernel: closed_call.15
$region0: #{closed_call.15}
  #allocation0 [shape = 'u32[]', space=smem, size = 0x4, offset = 0x4, fixed_abs, tag = 'smem constant byte address 0x4 - core index']
  #allocation1 [shape = 'u32[144,128]{1,0:T(1,128)}', space=vmem, size = 0x12000, scoped, tag = 'internal scratch']
  %s0 = inlined_call_operand.vmem [shape: bf16[2,1,8,32], index: 0, kind: input, shape index: {}]
  %s1 = inlined_call_operand.vmem [shape: bf16[2,1,24,32], index: 1, kind: input, shape index: {}]
  %s2 = inlined_call_operand.vmem [shape: bf16[2,1,24,32], index: 2, kind: input, shape index: {}]
  %s3 = inlined_call_operand.vmem [shape: f32[2,1,8,32], index: 3, kind: output, shape index: {}]
  %s4 = sld [smem:[#allocation0]]
  $region45: #{closed_call.15} parent=0
    _
  %s6 = ssub.s32 1, %s4
  %s7 = scalar_select 0, %s6, %s4
  loop: start=0, step=1, limit=4
  $region2: #{closed_call.15} parent=0 // loop_pre_header
    _
  $region3: #{closed_call.15} parent=0 // loop_header
    %s9 = sphi 0, %s13
    %p10 = scmp.ge.s32.totalorder %s9, 4
    %s16 = sphi 0, %s35
    %s17 = sphi 0, %s31
    %s18 = sphi 0, %s27
    %s19 = sphi 0, %s16
    %s20 = sphi 0, %s17
    %s21 = sphi 0, %s18
    %s22 = sphi 0, %s19
    %s23 = sphi 0, %s20
    %s24 = sphi 0, %s21
    %s42 = sphi 0, %s44
    %s45 = sphi 0, %s42
    %s46 = sphi 0, %s45
    %s62 = sphi 0, %s46
    %s70 = sphi 0, %s72
    %s73 = sphi 0, %s70
    %s74 = sphi 0, %s73
    %s90 = sphi 0, %s74
    %s98 = sphi 0, %s100
    %s101 = sphi 0, %s98
    %s102 = sphi 0, %s101
    %s118 = sphi 0, %s102
    %s128 = sphi 0, %s130
    %s131 = sphi 0, %s128
    %s132 = sphi 0, %s131
    %s148 = sphi 0, %s132
  $region4: #{closed_call.15} parent=0 // loop_header_branch
    %12 = sbr.rel (%p10) target = $region8
  $region5: #{closed_call.15} parent=0 // loop_body
    %s14 = ssub.s32 %s9, 1
    %s15 = ssub.s32 %s9, 2
    %s25 = sadd.s32 1, %s18
    %p26 = scmp.ge.s32.totalorder %s25, 1
    %s27 = scalar_select %p26, 0, %s25
    %s28 = sadd.s32 1, %s17
    %s29 = scalar_select %p26, %s28, %s17
    %p30 = scmp.ge.s32.totalorder %s29, 1
    %s31 = scalar_select %p30, 0, %s29
    %s32 = sadd.s32 1, %s16
    %s33 = scalar_select %p30, %s32, %s16
    %p34 = scmp.ge.s32.totalorder %s33, 2
    %s35 = scalar_select %p34, 0, %s33
    %s36 = ssub.s32 %s16, %s35
    %s37 = ssub.s32 %s17, %s31
    %s38 = sor.u32 %s36, %s37
    %s39 = ssub.s32 %s18, %s27
    %s40 = sor.u32 %s38, %s39
    %p41 = scmp.eq.s32.totalorder %s40, 0
    %s43 = sadd.s32 %s42, 1
    %s44 = scalar_select %p41, %s42, %s43
    %p47 = pneg %p41
    %p48 = scmp.eq.s32.totalorder %s9, 1
    %p49 = por %p47, %p48
    %p50 = scmp.ne.s32.totalorder %s42, %s45
    %p51 = scmp.eq.s32.totalorder %s9, 0
    %p52 = por %p50, %p51
    %p53 = scmp.ne.s32.totalorder %s42, %s45
    %p54 = scmp.eq.s32.totalorder %s14, 1
    %p55 = por %p53, %p54
    %p56 = scmp.ne.s32.totalorder %s45, %s46
    %p57 = scmp.eq.s32.totalorder %s14, 0
    %p58 = por %p56, %p57
    %p59 = scmp.ne.s32.totalorder %s45, %s46
    %p60 = scmp.eq.s32.totalorder %s15, 1
    %p61 = por %p59, %p60
    %p63 = scmp.ne.s32.totalorder %s46, %s62
    %p64 = scmp.eq.s32.totalorder %s15, 0
    %p65 = por %p63, %p64
    %s66 = ssub.s32 %s16, %s35
    %s67 = ssub.s32 %s17, %s31
    %s68 = sor.u32 %s66, %s67
    %p69 = scmp.eq.s32.totalorder %s68, 0
    %s71 = sadd.s32 %s70, 1
    %s72 = scalar_select %p69, %s70, %s71
    %p75 = pneg %p69
    %p76 = scmp.eq.s32.totalorder %s9, 1
    %p77 = por %p75, %p76
    %p78 = scmp.ne.s32.totalorder %s70, %s73
    %p79 = scmp.eq.s32.totalorder %s9, 0
    %p80 = por %p78, %p79
    %p81 = scmp.ne.s32.totalorder %s70, %s73
    %p82 = scmp.eq.s32.totalorder %s14, 1
    %p83 = por %p81, %p82
    %p84 = scmp.ne.s32.totalorder %s73, %s74
    %p85 = scmp.eq.s32.totalorder %s14, 0
    %p86 = por %p84, %p85
    %p87 = scmp.ne.s32.totalorder %s73, %s74
    %p88 = scmp.eq.s32.totalorder %s15, 1
    %p89 = por %p87, %p88
    %p91 = scmp.ne.s32.totalorder %s74, %s90
    %p92 = scmp.eq.s32.totalorder %s15, 0
    %p93 = por %p91, %p92
    %s94 = ssub.s32 %s16, %s35
    %s95 = ssub.s32 %s17, %s31
    %s96 = sor.u32 %s94, %s95
    %p97 = scmp.eq.s32.totalorder %s96, 0
    %s99 = sadd.s32 %s98, 1
    %s100 = scalar_select %p97, %s98, %s99
    %p103 = pneg %p97
    %p104 = scmp.eq.s32.totalorder %s9, 1
    %p105 = por %p103, %p104
    %p106 = scmp.ne.s32.totalorder %s98, %s101
    %p107 = scmp.eq.s32.totalorder %s9, 0
    %p108 = por %p106, %p107
    %p109 = scmp.ne.s32.totalorder %s98, %s101
    %p110 = scmp.eq.s32.totalorder %s14, 1
    %p111 = por %p109, %p110
    %p112 = scmp.ne.s32.totalorder %s101, %s102
    %p113 = scmp.eq.s32.totalorder %s14, 0
    %p114 = por %p112, %p113
    %p115 = scmp.ne.s32.totalorder %s101, %s102
    %p116 = scmp.eq.s32.totalorder %s15, 1
    %p117 = por %p115, %p116
    %p119 = scmp.ne.s32.totalorder %s102, %s118
    %p120 = scmp.eq.s32.totalorder %s15, 0
    %p121 = por %p119, %p120
    %s122 = ssub.s32 %s16, %s35
    %s123 = ssub.s32 %s17, %s31
    %s124 = sor.u32 %s122, %s123
    %s125 = ssub.s32 %s18, %s27
    %s126 = sor.u32 %s124, %s125
    %p127 = scmp.eq.s32.totalorder %s126, 0
    %s129 = sadd.s32 %s128, 1
    %s130 = scalar_select %p127, %s128, %s129
    %p133 = pneg %p127
    %p134 = scmp.eq.s32.totalorder %s9, 1
    %p135 = por %p133, %p134
    %p136 = scmp.ne.s32.totalorder %s128, %s131
    %p137 = scmp.eq.s32.totalorder %s9, 0
    %p138 = por %p136, %p137
    %p139 = scmp.ne.s32.totalorder %s128, %s131
    %p140 = scmp.eq.s32.totalorder %s14, 1
    %p141 = por %p139, %p140
    %p142 = scmp.ne.s32.totalorder %s131, %s132
    %p143 = scmp.eq.s32.totalorder %s14, 0
    %p144 = por %p142, %p143
    %p145 = scmp.ne.s32.totalorder %s131, %s132
    %p146 = scmp.eq.s32.totalorder %s15, 1
    %p147 = por %p145, %p146
    %p149 = scmp.ne.s32.totalorder %s132, %s148
    %p150 = scmp.eq.s32.totalorder %s15, 0
    %p151 = por %p149, %p150
    %p152 = scmp.le.s32.totalorder 1, %s9
    %p153 = scmp.lt.s32.totalorder %s9, 3
    %p154 = pnand %p152, %p153
    %p155 = pneg %p154
    // Predicated region
    $region9: #{closed_call.15} parent=5 // pred_check
      _
    $region10: #{closed_call.15} parent=5 // pred_check_branch
      %157 = sbr.rel (%p154) target = $region12
    $region11: #{closed_call.15} parent=5 // pred_region
      %s158 = ssub.s32 %s9, 1
    $region12: #{closed_call.15} parent=5 // pred_fallthru
      _
    %p159 = scmp.lt.s32.totalorder %s9, 2
    // Predicated region
    $region13: #{closed_call.15} parent=5 // pred_check
      %p160 = pneg %p159
    $region14: #{closed_call.15} parent=5 // pred_check_branch
      %162 = sbr.rel (%p160) target = $region16
    $region15: #{closed_call.15} parent=5 // pred_region
      // Predicated region
      $region17: #{closed_call.15} parent=15 // pred_check
        %p163 = pneg %p52
      $region18: #{closed_call.15} parent=15 // pred_check_branch
        %165 = sbr.rel (%p163) target = $region20
      $region19: #{closed_call.15} parent=15 // pred_region
        %p166 = scmp.lt.s32.totalorder %s16, 1
        %s167 = scalar_select %p166, %s16, 1
        %p168 = scmp.lt.s32.totalorder %s17, 0
        %s169 = scalar_select %p168, %s17, 0
        %p170 = scmp.lt.s32.totalorder %s18, 0
        %s171 = scalar_select %p170, %s18, 0
        %s172 = sadd.s32 %s171, %s169
        %s173 = sadd.s32 %s172, %s167
        %s174 = smul.addr %s173, 4
        %s175 = scalar_lea.vmem %s0, %s174
      $region20: #{closed_call.15} parent=15 // pred_fallthru
        _
      // Predicated region
      $region21: #{closed_call.15} parent=15 // pred_check
        %p176 = pneg %p80
      $region22: #{closed_call.15} parent=15 // pred_check_branch
        %178 = sbr.rel (%p176) target = $region24
      $region23: #{closed_call.15} parent=15 // pred_region
        %p179 = scmp.lt.s32.totalorder %s16, 1
        %s180 = scalar_select %p179, %s16, 1
        %p181 = scmp.lt.s32.totalorder %s17, 0
        %s182 = scalar_select %p181, %s17, 0
        %s183 = smul.addr %s182, 3
        %s184 = smul.addr %s180, 3
        %s185 = sadd.s32 %s183, %s184
        %s186 = smul.addr %s185, 4
        %s187 = scalar_lea.vmem %s1, %s186
      $region24: #{closed_call.15} parent=15 // pred_fallthru
        _
      // Predicated region
      $region25: #{closed_call.15} parent=15 // pred_check
        %p188 = pneg %p108
      $region26: #{closed_call.15} parent=15 // pred_check_branch
        %190 = sbr.rel (%p188) target = $region28
      $region27: #{closed_call.15} parent=15 // pred_region
        %p191 = scmp.lt.s32.totalorder %s16, 1
        %s192 = scalar_select %p191, %s16, 1
        %p193 = scmp.lt.s32.totalorder %s17, 0
        %s194 = scalar_select %p193, %s17, 0
        %s195 = smul.addr %s194, 3
        %s196 = smul.addr %s192, 3
        %s197 = sadd.s32 %s195, %s196
        %s198 = smul.addr %s197, 4
        %s199 = scalar_lea.vmem %s2, %s198
      $region28: #{closed_call.15} parent=15 // pred_fallthru
        _
    $region16: #{closed_call.15} parent=5 // pred_fallthru
      _
    %p200 = scmp.le.s32.totalorder 1, %s9
    %p201 = scmp.lt.s32.totalorder %s9, 3
    %p202 = pnand %p200, %p201
    %p203 = pneg %p202
    // Predicated region
    $region29: #{closed_call.15} parent=5 // pred_check
      _
    $region30: #{closed_call.15} parent=5 // pred_check_branch
      %205 = sbr.rel (%p202) target = $region32
    $region31: #{closed_call.15} parent=5 // pred_region
      %s206 = ssub.s32 %s9, 1
      %p207 = scmp.lt.s32.totalorder %s19, 1
      %s208 = scalar_select %p207, %s19, 1
      %p209 = scmp.lt.s32.totalorder %s20, 0
      %s210 = scalar_select %p209, %s20, 0
      %p211 = scmp.lt.s32.totalorder %s21, 0
      %s212 = scalar_select %p211, %s21, 0
      %s213 = sadd.s32 %s212, %s210
      %s214 = sadd.s32 %s213, %s208
      %s215 = smul.addr %s214, 4
      %s216 = scalar_lea.vmem %s0, %s215
      %p217 = pneg %p58
      %p218 = pneg %p55
      %p219 = scmp.lt.s32.totalorder %s19, 1
      %s220 = scalar_select %p219, %s19, 1
      %p221 = scmp.lt.s32.totalorder %s20, 0
      %s222 = scalar_select %p221, %s20, 0
      %s223 = smul.addr %s222, 3
      %s224 = smul.addr %s220, 3
      %s225 = sadd.s32 %s223, %s224
      %s226 = smul.addr %s225, 4
      %s227 = scalar_lea.vmem %s1, %s226
      %p228 = pneg %p86
      %p229 = pneg %p83
      %p230 = scmp.lt.s32.totalorder %s19, 1
      %s231 = scalar_select %p230, %s19, 1
      %p232 = scmp.lt.s32.totalorder %s20, 0
      %s233 = scalar_select %p232, %s20, 0
      %s234 = smul.addr %s233, 3
      %s235 = smul.addr %s231, 3
      %s236 = sadd.s32 %s234, %s235
      %s237 = smul.addr %s236, 4
      %s238 = scalar_lea.vmem %s2, %s237
      %p239 = pneg %p114
      %p240 = pneg %p111
      %p241 = pneg %p144
      %p242 = pneg %p141
      %p243 = scmp.lt.s32.totalorder %s19, 1
      %s244 = scalar_select %p243, %s19, 1
      %p245 = scmp.lt.s32.totalorder %s20, 0
      %s246 = scalar_select %p245, %s20, 0
      %p247 = scmp.lt.s32.totalorder %s21, 0
      %s248 = scalar_select %p247, %s21, 0
      %s249 = sadd.s32 %s248, %s246
      %s250 = sadd.s32 %s249, %s244
      %s251 = smul.addr %s250, 8
      %s252 = scalar_lea.vmem %s3, %s251
      %p253 = scmp.lt.s32.totalorder %s19, 1
      %s254 = scalar_select %p253, %s19, 1
      %p255 = scmp.lt.s32.totalorder %s20, 0
      %s256 = scalar_select %p255, %s20, 0
      %p257 = scmp.lt.s32.totalorder %s21, 0
      %s258 = scalar_select %p257, %s21, 0
      %s259 = sadd.s32 %s258, %s256
      %s260 = sadd.s32 %s259, %s254
      %s261 = smul.addr %s260, 4
      %s262 = scalar_lea.vmem %s0, %s261
      %p263 = scmp.lt.s32.totalorder %s19, 1
      %s264 = scalar_select %p263, %s19, 1
      %p265 = scmp.lt.s32.totalorder %s20, 0
      %s266 = scalar_select %p265, %s20, 0
      %s267 = smul.addr %s266, 3
      %s268 = smul.addr %s264, 3
      %s269 = sadd.s32 %s267, %s268
      %s270 = smul.addr %s269, 4
      %s271 = scalar_lea.vmem %s1, %s270
      %p272 = scmp.lt.s32.totalorder %s19, 1
      %s273 = scalar_select %p272, %s19, 1
      %p274 = scmp.lt.s32.totalorder %s20, 0
      %s275 = scalar_select %p274, %s20, 0
      %s276 = smul.addr %s275, 3
      %s277 = smul.addr %s273, 3
      %s278 = sadd.s32 %s276, %s277
      %s279 = smul.addr %s278, 4
      %s280 = scalar_lea.vmem %s2, %s279
      %p281 = scmp.lt.s32.totalorder %s19, 1
      %s282 = scalar_select %p281, %s19, 1
      %p283 = scmp.lt.s32.totalorder %s20, 0
      %s284 = scalar_select %p283, %s20, 0
      %p285 = scmp.lt.s32.totalorder %s21, 0
      %s286 = scalar_select %p285, %s21, 0
      %s287 = sadd.s32 %s286, %s284
      %s288 = sadd.s32 %s287, %s282
      %s289 = smul.addr %s288, 8
      %s290 = scalar_lea.vmem %s3, %s289
      %v292 = vld [vmem:[%s262] sm:$0xf]
      %v293 = vld [vmem:[%s271] sm:$0xf]
      %v294 = vld [vmem:[%s271 + $0x4] sm:$0xf]
      %v295 = vld [vmem:[%s271 + $0x8] sm:$0xf]
      %v296 = vld [vmem:[%s280] sm:$0xf]
      %v297 = vld [vmem:[%s280 + $0x4] sm:$0xf]
      %v298 = vld [vmem:[%s280 + $0x8] sm:$0xf]
      %v302 = vunpack.c.l.b16 %v293
      %v303 = vunpack.c.l.b16 %v294
      %v304 = vunpack.c.l.b16 %v295
      %v305 = vpack.c.b16 %v303, %v302
      %v306 = vpack.c.b16 %v304, %v304
      %vm307 = vcmask 261120
      %v309 = vsel %vm307, %v292, 0
      %v312 = vsel %vm307, %v305, 0
      %v315 = vsel %vm307, %v306, 0
      %317 = vmatprep.subr.bf16.mxu0 0
      %318 = vmatpush1.bf16.xpose.msra.mxu0 %v312
      %319 = vmatprep.subr.bf16.mxu0 0
      %320 = vmatpush1.bf16.xpose.msra.mxu0 %v315
      %321 = vmatprep.subr.bf16.mxu0 0
      %322 = vmatpush1.bf16.xpose.msra.mxu0 0
      %323 = vmatprep.subr.bf16.mxu0 0
      %324 = vmatpush1.bf16.xpose.msra.mxu0 0
      %325 = vmatprep.subr.bf16.mxu0 0
      %326 = vmatpush1.bf16.xpose.msra.mxu0 0
      %327 = vmatprep.subr.bf16.mxu0 0
      %328 = vmatpush1.bf16.xpose.msra.mxu0 0
      %329 = vmatprep.subr.bf16.mxu0 0
      %330 = vmatpush1.bf16.xpose.msra.mxu0 0
      %331 = vmatprep.subr.bf16.mxu0 0
      %332 = vmatpush1.bf16.xpose.msra.mxu0 0
      %333 = vmatprep.subr.bf16.mxu0 0
      %334 = vmatpush1.bf16.xpose.msra.mxu0 0
      %335 = vmatprep.subr.bf16.mxu0 0
      %336 = vmatpush1.bf16.xpose.msra.mxu0 0
      %337 = vmatprep.subr.bf16.mxu0 0
      %338 = vmatpush1.bf16.xpose.msra.mxu0 0
      %339 = vmatprep.subr.bf16.mxu0 0
      %340 = vmatpush1.bf16.xpose.msra.mxu0 0
      %341 = vmatprep.subr.bf16.mxu0 0
      %342 = vmatpush1.bf16.xpose.msra.mxu0 0
      %343 = vmatprep.subr.bf16.mxu0 0
      %344 = vmatpush1.bf16.xpose.msra.mxu0 0
      %345 = vmatprep.subr.bf16.mxu0 0
      %346 = vmatpush1.bf16.xpose.msra.mxu0 0
      %347 = vmatprep.subr.bf16.mxu0 0
      %348 = vmatpush1.bf16.xpose.msra.mxu0 0
      %349 = vmatprep.mubr.bf16.mxu0 0
      %350 = vmatmul.mubr.bf16.gmra.mrb[0].mxu0 %v309
      %v351 = vpop.f32.mrb[0].mxu0
      %v352 = vadd.f32 0.0, %v351
      %v353 = vpop.f32.mrb[0].mxu0
      %v354 = vpop.f32.mrb[0].mxu0
      %v355 = vpop.f32.mrb[0].mxu0
      %356 = vdwg.mxu0
      %vm357 = vcmask 195584
      %v358 = vsel %vm357, %v352, -inf
      %359 = vmax.xlane.f32.xlu0 %v358
      %v360 = vpop.xlane.xlu0 %359
      %v361 = vsub.f32 %v352, %v360
      %v362 = vmul.f32 %v361, 1.442695
      %v363 = vpow.pop %v362
      %v364 = vsel %vm357, %v363, 0.0
      %365 = vadd.xlane.f32.xlu0 %v364
      %v366 = vpop.xlane.xlu0 %365
      %v367 = vpack.c.bf16 %v363, %v363
      %v371 = vunpack.c.l.b16 %v296
      %v372 = vunpack.c.l.b16 %v297
      %v373 = vunpack.c.l.b16 %v298
      %v374 = vpack.c.b16 %v372, %v371
      %v375 = vpack.c.b16 %v373, %v373
      %v378 = vsel %vm357, %v367, 0
      %vm380 = vcmask 1043456
      %v382 = vsel %vm380, %v375, 0
      %384 = vmatprep.subr.bf16.mxu0 0
      %385 = vmatpush1.bf16.msra.mxu0 %v374
      %386 = vmatprep.subr.bf16.mxu0 0
      %387 = vmatpush1.bf16.msra.mxu0 %v382
      %388 = vmatprep.subr.bf16.mxu0 0
      %389 = vmatpush1.bf16.msra.mxu0 0
      %390 = vmatprep.subr.bf16.mxu0 0
      %391 = vmatpush1.bf16.msra.mxu0 0
      %392 = vmatprep.subr.bf16.mxu0 0
      %393 = vmatpush1.bf16.msra.mxu0 0
      %394 = vmatprep.subr.bf16.mxu0 0
      %395 = vmatpush1.bf16.msra.mxu0 0
      %396 = vmatprep.subr.bf16.mxu0 0
      %397 = vmatpush1.bf16.msra.mxu0 0
      %398 = vmatprep.subr.bf16.mxu0 0
      %399 = vmatpush1.bf16.msra.mxu0 0
      %400 = vmatprep.subr.bf16.mxu0 0
      %401 = vmatpush1.bf16.msra.mxu0 0
      %402 = vmatprep.subr.bf16.mxu0 0
      %403 = vmatpush1.bf16.msra.mxu0 0
      %404 = vmatprep.subr.bf16.mxu0 0
      %405 = vmatpush1.bf16.msra.mxu0 0
      %406 = vmatprep.subr.bf16.mxu0 0
      %407 = vmatpush1.bf16.msra.mxu0 0
      %408 = vmatprep.subr.bf16.mxu0 0
      %409 = vmatpush1.bf16.msra.mxu0 0
      %410 = vmatprep.subr.bf16.mxu0 0
      %411 = vmatpush1.bf16.msra.mxu0 0
      %412 = vmatprep.subr.bf16.mxu0 0
      %413 = vmatpush1.bf16.msra.mxu0 0
      %414 = vmatprep.subr.bf16.mxu0 0
      %415 = vmatpush1.bf16.msra.mxu0 0
      %416 = vmatprep.mubr.bf16.mxu0 0
      %417 = vmatmul.mubr.bf16.gmra.mrb[0].mxu0 %v378
      %v418 = vpop.f32.mrb[0].mxu0
      %v419 = vadd.f32 0.0, %v418
      %v420 = vpop.f32.mrb[0].mxu0
      %v421 = vpop.f32.mrb[0].mxu0
      %v422 = vpop.f32.mrb[0].mxu0
      %423 = vdwg.mxu0
      %v424 = vrcp.pop %v366
      %v425 = vmul.f32 %v419, %v424
      %426 = vst.msk [vmem:[%s290] sm:$0xff] %vm307, %v425
      %p427 = scmp.lt.s32.totalorder %s19, 1
      %s428 = scalar_select %p427, %s19, 1
      %p429 = scmp.lt.s32.totalorder %s20, 0
      %s430 = scalar_select %p429, %s20, 0
      %p431 = scmp.lt.s32.totalorder %s21, 0
      %s432 = scalar_select %p431, %s21, 0
      %s433 = sadd.s32 %s432, %s430
      %s434 = sadd.s32 %s433, %s428
      %s435 = smul.addr %s434, 8
      %s436 = scalar_lea.vmem %s3, %s435
      // Predicated region
      $region33: #{closed_call.15} parent=31 // pred_check
        %p437 = pneg %p141
      $region34: #{closed_call.15} parent=31 // pred_check_branch
        %439 = sbr.rel (%p437) target = $region36
      $region35: #{closed_call.15} parent=31 // pred_region
        _
      $region36: #{closed_call.15} parent=31 // pred_fallthru
        _
    $region32: #{closed_call.15} parent=5 // pred_fallthru
      _
    %p440 = scmp.le.s32.totalorder 2, %s9
    // Predicated region
    $region37: #{closed_call.15} parent=5 // pred_check
      %p441 = pneg %p440
    $region38: #{closed_call.15} parent=5 // pred_check_branch
      %443 = sbr.rel (%p441) target = $region40
    $region39: #{closed_call.15} parent=5 // pred_region
      %s444 = ssub.s32 %s9, 2
      // Predicated region
      $region41: #{closed_call.15} parent=39 // pred_check
        %p445 = pneg %p147
      $region42: #{closed_call.15} parent=39 // pred_check_branch
        %447 = sbr.rel (%p445) target = $region44
      $region43: #{closed_call.15} parent=39 // pred_region
        %p448 = scmp.lt.s32.totalorder %s22, 1
        %s449 = scalar_select %p448, %s22, 1
        %p450 = scmp.lt.s32.totalorder %s23, 0
        %s451 = scalar_select %p450, %s23, 0
        %p452 = scmp.lt.s32.totalorder %s24, 0
        %s453 = scalar_select %p452, %s24, 0
        %s454 = sadd.s32 %s453, %s451
        %s455 = sadd.s32 %s454, %s449
        %s456 = smul.addr %s455, 8
        %s457 = scalar_lea.vmem %s3, %s456
      $region44: #{closed_call.15} parent=39 // pred_fallthru
        _
    $region40: #{closed_call.15} parent=5 // pred_fallthru
      _
  $region6: #{closed_call.15} parent=0 // loop_footer
    %s13 = sadd.s32 1, %s9
  $region7: #{closed_call.15} parent=0 // loop_footer_branch
    %8 = sbr.rel target = $region3
  $region8: #{closed_call.15} parent=0 // loop_exit
    _

// kernel: closed_call.16
$region0: #{closed_call.16}
  #allocation0 [shape = 'u32[]', space=smem, size = 0x4, offset = 0x4, fixed_abs, tag = 'smem constant byte address 0x4 - core index']
  #allocation1 [shape = 'u32[144,128]{1,0:T(1,128)}', space=vmem, size = 0x12000, scoped, tag = 'internal scratch']
  %s0 = inlined_call_operand.vmem [shape: bf16[2,4,24,8], index: 0, kind: input, shape index: {}]
  %s1 = inlined_call_operand.vmem [shape: bf16[2,4,24,8], index: 1, kind: input, shape index: {}]
  %s2 = inlined_call_operand.vmem [shape: bf16[2,4,24,8], index: 2, kind: input, shape index: {}]
  %s3 = inlined_call_operand.vmem [shape: f32[2,4,24,8], index: 3, kind: output, shape index: {}]
  %s4 = sld [smem:[#allocation0]]
  $region45: #{closed_call.16} parent=0
    _
  %s6 = ssub.s32 1, %s4
  %s7 = scalar_select 0, %s6, %s4
  loop: start=0, step=1, limit=4
  $region2: #{closed_call.16} parent=0 // loop_pre_header
    _
  $region3: #{closed_call.16} parent=0 // loop_header
    %s9 = sphi 0, %s13
    %p10 = scmp.ge.s32.totalorder %s9, 4
    %s16 = sphi 0, %s35
    %s17 = sphi 0, %s31
    %s18 = sphi 0, %s27
    %s19 = sphi 0, %s16
    %s20 = sphi 0, %s17
    %s21 = sphi 0, %s18
    %s22 = sphi 0, %s19
    %s23 = sphi 0, %s20
    %s24 = sphi 0, %s21
    %s42 = sphi 0, %s44
    %s45 = sphi 0, %s42
    %s46 = sphi 0, %s45
    %s62 = sphi 0, %s46
    %s70 = sphi 0, %s72
    %s73 = sphi 0, %s70
    %s74 = sphi 0, %s73
    %s90 = sphi 0, %s74
    %s98 = sphi 0, %s100
    %s101 = sphi 0, %s98
    %s102 = sphi 0, %s101
    %s118 = sphi 0, %s102
    %s128 = sphi 0, %s130
    %s131 = sphi 0, %s128
    %s132 = sphi 0, %s131
    %s148 = sphi 0, %s132
  $region4: #{closed_call.16} parent=0 // loop_header_branch
    %12 = sbr.rel (%p10) target = $region8
  $region5: #{closed_call.16} parent=0 // loop_body
    %s14 = ssub.s32 %s9, 1
    %s15 = ssub.s32 %s9, 2
    %s25 = sadd.s32 1, %s18
    %p26 = scmp.ge.s32.totalorder %s25, 1
    %s27 = scalar_select %p26, 0, %s25
    %s28 = sadd.s32 1, %s17
    %s29 = scalar_select %p26, %s28, %s17
    %p30 = scmp.ge.s32.totalorder %s29, 1
    %s31 = scalar_select %p30, 0, %s29
    %s32 = sadd.s32 1, %s16
    %s33 = scalar_select %p30, %s32, %s16
    %p34 = scmp.ge.s32.totalorder %s33, 2
    %s35 = scalar_select %p34, 0, %s33
    %s36 = ssub.s32 %s16, %s35
    %s37 = ssub.s32 %s17, %s31
    %s38 = sor.u32 %s36, %s37
    %s39 = ssub.s32 %s18, %s27
    %s40 = sor.u32 %s38, %s39
    %p41 = scmp.eq.s32.totalorder %s40, 0
    %s43 = sadd.s32 %s42, 1
    %s44 = scalar_select %p41, %s42, %s43
    %p47 = pneg %p41
    %p48 = scmp.eq.s32.totalorder %s9, 1
    %p49 = por %p47, %p48
    %p50 = scmp.ne.s32.totalorder %s42, %s45
    %p51 = scmp.eq.s32.totalorder %s9, 0
    %p52 = por %p50, %p51
    %p53 = scmp.ne.s32.totalorder %s42, %s45
    %p54 = scmp.eq.s32.totalorder %s14, 1
    %p55 = por %p53, %p54
    %p56 = scmp.ne.s32.totalorder %s45, %s46
    %p57 = scmp.eq.s32.totalorder %s14, 0
    %p58 = por %p56, %p57
    %p59 = scmp.ne.s32.totalorder %s45, %s46
    %p60 = scmp.eq.s32.totalorder %s15, 1
    %p61 = por %p59, %p60
    %p63 = scmp.ne.s32.totalorder %s46, %s62
    %p64 = scmp.eq.s32.totalorder %s15, 0
    %p65 = por %p63, %p64
    %s66 = ssub.s32 %s16, %s35
    %s67 = ssub.s32 %s17, %s31
    %s68 = sor.u32 %s66, %s67
    %p69 = scmp.eq.s32.totalorder %s68, 0
    %s71 = sadd.s32 %s70, 1
    %s72 = scalar_select %p69, %s70, %s71
    %p75 = pneg %p69
    %p76 = scmp.eq.s32.totalorder %s9, 1
    %p77 = por %p75, %p76
    %p78 = scmp.ne.s32.totalorder %s70, %s73
    %p79 = scmp.eq.s32.totalorder %s9, 0
    %p80 = por %p78, %p79
    %p81 = scmp.ne.s32.totalorder %s70, %s73
    %p82 = scmp.eq.s32.totalorder %s14, 1
    %p83 = por %p81, %p82
    %p84 = scmp.ne.s32.totalorder %s73, %s74
    %p85 = scmp.eq.s32.totalorder %s14, 0
    %p86 = por %p84, %p85
    %p87 = scmp.ne.s32.totalorder %s73, %s74
    %p88 = scmp.eq.s32.totalorder %s15, 1
    %p89 = por %p87, %p88
    %p91 = scmp.ne.s32.totalorder %s74, %s90
    %p92 = scmp.eq.s32.totalorder %s15, 0
    %p93 = por %p91, %p92
    %s94 = ssub.s32 %s16, %s35
    %s95 = ssub.s32 %s17, %s31
    %s96 = sor.u32 %s94, %s95
    %p97 = scmp.eq.s32.totalorder %s96, 0
    %s99 = sadd.s32 %s98, 1
    %s100 = scalar_select %p97, %s98, %s99
    %p103 = pneg %p97
    %p104 = scmp.eq.s32.totalorder %s9, 1
    %p105 = por %p103, %p104
    %p106 = scmp.ne.s32.totalorder %s98, %s101
    %p107 = scmp.eq.s32.totalorder %s9, 0
    %p108 = por %p106, %p107
    %p109 = scmp.ne.s32.totalorder %s98, %s101
    %p110 = scmp.eq.s32.totalorder %s14, 1
    %p111 = por %p109, %p110
    %p112 = scmp.ne.s32.totalorder %s101, %s102
    %p113 = scmp.eq.s32.totalorder %s14, 0
    %p114 = por %p112, %p113
    %p115 = scmp.ne.s32.totalorder %s101, %s102
    %p116 = scmp.eq.s32.totalorder %s15, 1
    %p117 = por %p115, %p116
    %p119 = scmp.ne.s32.totalorder %s102, %s118
    %p120 = scmp.eq.s32.totalorder %s15, 0
    %p121 = por %p119, %p120
    %s122 = ssub.s32 %s16, %s35
    %s123 = ssub.s32 %s17, %s31
    %s124 = sor.u32 %s122, %s123
    %s125 = ssub.s32 %s18, %s27
    %s126 = sor.u32 %s124, %s125
    %p127 = scmp.eq.s32.totalorder %s126, 0
    %s129 = sadd.s32 %s128, 1
    %s130 = scalar_select %p127, %s128, %s129
    %p133 = pneg %p127
    %p134 = scmp.eq.s32.totalorder %s9, 1
    %p135 = por %p133, %p134
    %p136 = scmp.ne.s32.totalorder %s128, %s131
    %p137 = scmp.eq.s32.totalorder %s9, 0
    %p138 = por %p136, %p137
    %p139 = scmp.ne.s32.totalorder %s128, %s131
    %p140 = scmp.eq.s32.totalorder %s14, 1
    %p141 = por %p139, %p140
    %p142 = scmp.ne.s32.totalorder %s131, %s132
    %p143 = scmp.eq.s32.totalorder %s14, 0
    %p144 = por %p142, %p143
    %p145 = scmp.ne.s32.totalorder %s131, %s132
    %p146 = scmp.eq.s32.totalorder %s15, 1
    %p147 = por %p145, %p146
    %p149 = scmp.ne.s32.totalorder %s132, %s148
    %p150 = scmp.eq.s32.totalorder %s15, 0
    %p151 = por %p149, %p150
    %p152 = scmp.le.s32.totalorder 1, %s9
    %p153 = scmp.lt.s32.totalorder %s9, 3
    %p154 = pnand %p152, %p153
    %p155 = pneg %p154
    // Predicated region
    $region9: #{closed_call.16} parent=5 // pred_check
      _
    $region10: #{closed_call.16} parent=5 // pred_check_branch
      %157 = sbr.rel (%p154) target = $region12
    $region11: #{closed_call.16} parent=5 // pred_region
      %s158 = ssub.s32 %s9, 1
    $region12: #{closed_call.16} parent=5 // pred_fallthru
      _
    %p159 = scmp.lt.s32.totalorder %s9, 2
    // Predicated region
    $region13: #{closed_call.16} parent=5 // pred_check
      %p160 = pneg %p159
    $region14: #{closed_call.16} parent=5 // pred_check_branch
      %162 = sbr.rel (%p160) target = $region16
    $region15: #{closed_call.16} parent=5 // pred_region
      // Predicated region
      $region17: #{closed_call.16} parent=15 // pred_check
        %p163 = pneg %p52
      $region18: #{closed_call.16} parent=15 // pred_check_branch
        %165 = sbr.rel (%p163) target = $region20
      $region19: #{closed_call.16} parent=15 // pred_region
        %s166 = smul.u32 4, %s17
        %s167 = smul.u32 3, %s18
        %p168 = scmp.lt.s32.totalorder %s16, 1
        %s169 = scalar_select %p168, %s16, 1
        %p170 = scmp.lt.s32.totalorder %s166, 3
        %s171 = scalar_select %p170, %s166, 3
        %p172 = scmp.lt.s32.totalorder %s167, 2
        %s173 = scalar_select %p172, %s167, 2
        %s174 = smul.addr %s171, 3
        %s175 = sadd.s32 %s173, %s174
        %s176 = smul.addr %s169, 12
        %s177 = sadd.s32 %s175, %s176
        %s178 = smul.addr %s177, 4
        %s179 = scalar_lea.vmem %s0, %s178
        %s180 = smul.u32 4, %s17
        %s181 = smul.u32 3, %s18
      $region20: #{closed_call.16} parent=15 // pred_fallthru
        _
      // Predicated region
      $region21: #{closed_call.16} parent=15 // pred_check
        %p182 = pneg %p80
      $region22: #{closed_call.16} parent=15 // pred_check_branch
        %184 = sbr.rel (%p182) target = $region24
      $region23: #{closed_call.16} parent=15 // pred_region
        %s185 = smul.u32 4, %s17
        %p186 = scmp.lt.s32.totalorder %s16, 1
        %s187 = scalar_select %p186, %s16, 1
        %p188 = scmp.lt.s32.totalorder %s185, 3
        %s189 = scalar_select %p188, %s185, 3
        %s190 = smul.addr %s189, 3
        %s191 = smul.addr %s187, 12
        %s192 = sadd.s32 %s190, %s191
        %s193 = smul.addr %s192, 4
        %s194 = scalar_lea.vmem %s1, %s193
        %s195 = smul.u32 4, %s17
      $region24: #{closed_call.16} parent=15 // pred_fallthru
        _
      // Predicated region
      $region25: #{closed_call.16} parent=15 // pred_check
        %p196 = pneg %p108
      $region26: #{closed_call.16} parent=15 // pred_check_branch
        %198 = sbr.rel (%p196) target = $region28
      $region27: #{closed_call.16} parent=15 // pred_region
        %s199 = smul.u32 4, %s17
        %p200 = scmp.lt.s32.totalorder %s16, 1
        %s201 = scalar_select %p200, %s16, 1
        %p202 = scmp.lt.s32.totalorder %s199, 3
        %s203 = scalar_select %p202, %s199, 3
        %s204 = smul.addr %s203, 3
        %s205 = smul.addr %s201, 12
        %s206 = sadd.s32 %s204, %s205
        %s207 = smul.addr %s206, 4
        %s208 = scalar_lea.vmem %s2, %s207
        %s209 = smul.u32 4, %s17
      $region28: #{closed_call.16} parent=15 // pred_fallthru
        _
    $region16: #{closed_call.16} parent=5 // pred_fallthru
      _
    %p210 = scmp.le.s32.totalorder 1, %s9
    %p211 = scmp.lt.s32.totalorder %s9, 3
    %p212 = pnand %p210, %p211
    %p213 = pneg %p212
    // Predicated region
    $region29: #{closed_call.16} parent=5 // pred_check
      _
    $region30: #{closed_call.16} parent=5 // pred_check_branch
      %215 = sbr.rel (%p212) target = $region32
    $region31: #{closed_call.16} parent=5 // pred_region
      %s216 = ssub.s32 %s9, 1
      %s217 = smul.u32 4, %s20
      %s218 = smul.u32 3, %s21
      %p219 = scmp.lt.s32.totalorder %s19, 1
      %s220 = scalar_select %p219, %s19, 1
      %p221 = scmp.lt.s32.totalorder %s217, 3
      %s222 = scalar_select %p221, %s217, 3
      %p223 = scmp.lt.s32.totalorder %s218, 2
      %s224 = scalar_select %p223, %s218, 2
      %s225 = smul.addr %s222, 3
      %s226 = sadd.s32 %s224, %s225
      %s227 = smul.addr %s220, 12
      %s228 = sadd.s32 %s226, %s227
      %s229 = smul.addr %s228, 4
      %s230 = scalar_lea.vmem %s0, %s229
      %p231 = pneg %p58
      %p232 = pneg %p55
      %s233 = smul.u32 4, %s20
      %p234 = scmp.lt.s32.totalorder %s19, 1
      %s235 = scalar_select %p234, %s19, 1
      %p236 = scmp.lt.s32.totalorder %s233, 3
      %s237 = scalar_select %p236, %s233, 3
      %s238 = smul.addr %s237, 3
      %s239 = smul.addr %s235, 12
      %s240 = sadd.s32 %s238, %s239
      %s241 = smul.addr %s240, 4
      %s242 = scalar_lea.vmem %s1, %s241
      %p243 = pneg %p86
      %p244 = pneg %p83
      %s245 = smul.u32 4, %s20
      %p246 = scmp.lt.s32.totalorder %s19, 1
      %s247 = scalar_select %p246, %s19, 1
      %p248 = scmp.lt.s32.totalorder %s245, 3
      %s249 = scalar_select %p248, %s245, 3
      %s250 = smul.addr %s249, 3
      %s251 = smul.addr %s247, 12
      %s252 = sadd.s32 %s250, %s251
      %s253 = smul.addr %s252, 4
      %s254 = scalar_lea.vmem %s2, %s253
      %p255 = pneg %p114
      %p256 = pneg %p111
      %p257 = pneg %p144
      %p258 = pneg %p141
      %s259 = smul.u32 4, %s20
      %s260 = smul.u32 3, %s21
      %p261 = scmp.lt.s32.totalorder %s19, 1
      %s262 = scalar_select %p261, %s19, 1
      %p263 = scmp.lt.s32.totalorder %s259, 3
      %s264 = scalar_select %p263, %s259, 3
      %p265 = scmp.lt.s32.totalorder %s260, 2
      %s266 = scalar_select %p265, %s260, 2
      %s267 = smul.addr %s264, 3
      %s268 = sadd.s32 %s266, %s267
      %s269 = smul.addr %s262, 12
      %s270 = sadd.s32 %s268, %s269
      %s271 = smul.addr %s270, 8
      %s272 = scalar_lea.vmem %s3, %s271
      %s273 = smul.u32 4, %s20
      %s274 = smul.u32 3, %s21
      %p275 = scmp.lt.s32.totalorder %s19, 1
      %s276 = scalar_select %p275, %s19, 1
      %p277 = scmp.lt.s32.totalorder %s273, 3
      %s278 = scalar_select %p277, %s273, 3
      %p279 = scmp.lt.s32.totalorder %s274, 2
      %s280 = scalar_select %p279, %s274, 2
      %s281 = smul.addr %s278, 3
      %s282 = sadd.s32 %s280, %s281
      %s283 = smul.addr %s276, 12
      %s284 = sadd.s32 %s282, %s283
      %s285 = smul.addr %s284, 4
      %s286 = scalar_lea.vmem %s0, %s285
      %s287 = smul.u32 4, %s20
      %s288 = smul.u32 3, %s21
      %s289 = smul.u32 4, %s20
      %p290 = scmp.lt.s32.totalorder %s19, 1
      %s291 = scalar_select %p290, %s19, 1
      %p292 = scmp.lt.s32.totalorder %s289, 3
      %s293 = scalar_select %p292, %s289, 3
      %s294 = smul.addr %s293, 3
      %s295 = smul.addr %s291, 12
      %s296 = sadd.s32 %s294, %s295
      %s297 = smul.addr %s296, 4
      %s298 = scalar_lea.vmem %s1, %s297
      %s299 = smul.u32 4, %s20
      %s300 = smul.u32 4, %s20
      %p301 = scmp.lt.s32.totalorder %s19, 1
      %s302 = scalar_select %p301, %s19, 1
      %p303 = scmp.lt.s32.totalorder %s300, 3
      %s304 = scalar_select %p303, %s300, 3
      %s305 = smul.addr %s304, 3
      %s306 = smul.addr %s302, 12
      %s307 = sadd.s32 %s305, %s306
      %s308 = smul.addr %s307, 4
      %s309 = scalar_lea.vmem %s2, %s308
      %s310 = smul.u32 4, %s20
      %s311 = smul.u32 4, %s20
      %s312 = smul.u32 3, %s21
      %p313 = scmp.lt.s32.totalorder %s19, 1
      %s314 = scalar_select %p313, %s19, 1
      %p315 = scmp.lt.s32.totalorder %s311, 3
      %s316 = scalar_select %p315, %s311, 3
      %p317 = scmp.lt.s32.totalorder %s312, 2
      %s318 = scalar_select %p317, %s312, 2
      %s319 = smul.addr %s316, 3
      %s320 = sadd.s32 %s318, %s319
      %s321 = smul.addr %s314, 12
      %s322 = sadd.s32 %s320, %s321
      %s323 = smul.addr %s322, 8
      %s324 = scalar_lea.vmem %s3, %s323
      %s325 = smul.u32 4, %s20
      %s326 = smul.u32 3, %s21
      %v328 = vld [vmem:[%s286] sm:$0xf]
      %v329 = vld [vmem:[%s286 + $0x4] sm:$0xf]
      %v330 = vld [vmem:[%s286 + $0x8] sm:$0xf]
      %v331 = vld [vmem:[%s286 + $0xc] sm:$0xf]
      %v332 = vld [vmem:[%s286 + $0x10] sm:$0xf]
      %v333 = vld [vmem:[%s286 + $0x14] sm:$0xf]
      %v334 = vld [vmem:[%s286 + $0x18] sm:$0xf]
      %v335 = vld [vmem:[%s286 + $0x1c] sm:$0xf]
      %v336 = vld [vmem:[%s286 + $0x20] sm:$0xf]
      %v337 = vld [vmem:[%s286 + $0x24] sm:$0xf]
      %v338 = vld [vmem:[%s286 + $0x28] sm:$0xf]
      %v339 = vld [vmem:[%s286 + $0x2c] sm:$0xf]
      %v340 = vld [vmem:[%s298] sm:$0xf]
      %v341 = vld [vmem:[%s298 + $0x4] sm:$0xf]
      %v342 = vld [vmem:[%s298 + $0x8] sm:$0xf]
      %v343 = vld [vmem:[%s298 + $0xc] sm:$0xf]
      %v344 = vld [vmem:[%s298 + $0x10] sm:$0xf]
      %v345 = vld [vmem:[%s298 + $0x14] sm:$0xf]
      %v346 = vld [vmem:[%s298 + $0x18] sm:$0xf]
      %v347 = vld [vmem:[%s298 + $0x1c] sm:$0xf]
      %v348 = vld [vmem:[%s298 + $0x20] sm:$0xf]
      %v349 = vld [vmem:[%s298 + $0x24] sm:$0xf]
      %v350 = vld [vmem:[%s298 + $0x28] sm:$0xf]
      %v351 = vld [vmem:[%s298 + $0x2c] sm:$0xf]
      %v352 = vld [vmem:[%s309] sm:$0xf]
      %v353 = vld [vmem:[%s309 + $0x4] sm:$0xf]
      %v354 = vld [vmem:[%s309 + $0x8] sm:$0xf]
      %v355 = vld [vmem:[%s309 + $0xc] sm:$0xf]
      %v356 = vld [vmem:[%s309 + $0x10] sm:$0xf]
      %v357 = vld [vmem:[%s309 + $0x14] sm:$0xf]
      %v358 = vld [vmem:[%s309 + $0x18] sm:$0xf]
      %v359 = vld [vmem:[%s309 + $0x1c] sm:$0xf]
      %v360 = vld [vmem:[%s309 + $0x20] sm:$0xf]
      %v361 = vld [vmem:[%s309 + $0x24] sm:$0xf]
      %v362 = vld [vmem:[%s309 + $0x28] sm:$0xf]
      %v363 = vld [vmem:[%s309 + $0x2c] sm:$0xf]
      %v367 = vunpack.c.l.b16 %v328
      %v368 = vunpack.c.l.b16 %v329
      %v369 = vunpack.c.l.b16 %v330
      %v370 = vpack.c.b16 %v368, %v367
      %v371 = vpack.c.b16 %v369, %v369
      %v375 = vunpack.c.l.b16 %v340
      %v376 = vunpack.c.l.b16 %v341
      %v377 = vunpack.c.l.b16 %v342
      %v378 = vpack.c.b16 %v376, %v375
      %v379 = vpack.c.b16 %v377, %v377
      %vm380 = vcmask 64512
      %v382 = vsel %vm380, %v370, 0
      %v385 = vsel %vm380, %v371, 0
      %v388 = vsel %vm380, %v378, 0
      %v391 = vsel %vm380, %v379, 0
      %393 = vmatprep.subr.bf16.mxu0 0
      %394 = vmatpush1.bf16.xpose.msra.mxu0 %v388
      %395 = vmatprep.subr.bf16.mxu0 0
      %396 = vmatpush1.bf16.xpose.msra.mxu0 %v391
      %397 = vmatprep.subr.bf16.mxu0 0
      %398 = vmatpush1.bf16.xpose.msra.mxu0 0
      %399 = vmatprep.subr.bf16.mxu0 0
      %400 = vmatpush1.bf16.xpose.msra.mxu0 0
      %401 = vmatprep.subr.bf16.mxu0 0
      %402 = vmatpush1.bf16.xpose.msra.mxu0 0
      %403 = vmatprep.subr.bf16.mxu0 0
      %404 = vmatpush1.bf16.xpose.msra.mxu0 0
      %405 = vmatprep.subr.bf16.mxu0 0
      %406 = vmatpush1.bf16.xpose.msra.mxu0 0
      %407 = vmatprep.subr.bf16.mxu0 0
      %408 = vmatpush1.bf16.xpose.msra.mxu0 0
      %409 = vmatprep.subr.bf16.mxu0 0
      %410 = vmatpush1.bf16.xpose.msra.mxu0 0
      %411 = vmatprep.subr.bf16.mxu0 0
      %412 = vmatpush1.bf16.xpose.msra.mxu0 0
      %413 = vmatprep.subr.bf16.mxu0 0
      %414 = vmatpush1.bf16.xpose.msra.mxu0 0
      %415 = vmatprep.subr.bf16.mxu0 0
      %416 = vmatpush1.bf16.xpose.msra.mxu0 0
      %417 = vmatprep.subr.bf16.mxu0 0
      %418 = vmatpush1.bf16.xpose.msra.mxu0 0
      %419 = vmatprep.subr.bf16.mxu0 0
      %420 = vmatpush1.bf16.xpose.msra.mxu0 0
      %421 = vmatprep.subr.bf16.mxu0 0
      %422 = vmatpush1.bf16.xpose.msra.mxu0 0
      %423 = vmatprep.subr.bf16.mxu0 0
      %424 = vmatpush1.bf16.xpose.msra.mxu0 0
      %425 = vmatprep.mubr.bf16.mxu0 0
      %426 = vmatmul.mubr.bf16.gmra.mrb[0].mxu0 %v382
      %v427 = vpop.f32.mrb[0].mxu0
      %v428 = vadd.f32 0.0, %v427
      %v429 = vpop.f32.mrb[0].mxu0
      %v430 = vpop.f32.mrb[0].mxu0
      %v431 = vadd.f32 0.0, %v430
      %v432 = vpop.f32.mrb[0].mxu0
      %433 = vmatprep.mubr.bf16.mxu0 0
      %434 = vmatmul.mubr.bf16.gmra.mrb[0].mxu0 %v385
      %v435 = vpop.f32.mrb[0].mxu0
      %v436 = vadd.f32 0.0, %v435
      %v437 = vpop.f32.mrb[0].mxu0
      %v438 = vpop.f32.mrb[0].mxu0
      %v439 = vpop.f32.mrb[0].mxu0
      %440 = vdwg.mxu0
      %v444 = vunpack.c.l.b16 %v331
      %v445 = vunpack.c.l.b16 %v332
      %v446 = vunpack.c.l.b16 %v333
      %v447 = vpack.c.b16 %v445, %v444
      %v448 = vpack.c.b16 %v446, %v446
      %v452 = vunpack.c.l.b16 %v343
      %v453 = vunpack.c.l.b16 %v344
      %v454 = vunpack.c.l.b16 %v345
      %v455 = vpack.c.b16 %v453, %v452
      %v456 = vpack.c.b16 %v454, %v454
      %v458 = vsel %vm380, %v447, 0
      %v461 = vsel %vm380, %v448, 0
      %v464 = vsel %vm380, %v455, 0
      %v467 = vsel %vm380, %v456, 0
      %469 = vmatprep.subr.bf16.mxu0 0
      %470 = vmatpush1.bf16.xpose.msra.mxu0 %v464
      %471 = vmatprep.subr.bf16.mxu0 0
      %472 = vmatpush1.bf16.xpose.msra.mxu0 %v467
      %473 = vmatprep.subr.bf16.mxu0 0
      %474 = vmatpush1.bf16.xpose.msra.mxu0 0
      %475 = vmatprep.subr.bf16.mxu0 0
      %476 = vmatpush1.bf16.xpose.msra.mxu0 0
      %477 = vmatprep.subr.bf16.mxu0 0
      %478 = vmatpush1.bf16.xpose.msra.mxu0 0
      %479 = vmatprep.subr.bf16.mxu0 0
      %480 = vmatpush1.bf16.xpose.msra.mxu0 0
      %481 = vmatprep.subr.bf16.mxu0 0
      %482 = vmatpush1.bf16.xpose.msra.mxu0 0
      %483 = vmatprep.subr.bf16.mxu0 0
      %484 = vmatpush1.bf16.xpose.msra.mxu0 0
      %485 = vmatprep.subr.bf16.mxu0 0
      %486 = vmatpush1.bf16.xpose.msra.mxu0 0
      %487 = vmatprep.subr.bf16.mxu0 0
      %488 = vmatpush1.bf16.xpose.msra.mxu0 0
      %489 = vmatprep.subr.bf16.mxu0 0
      %490 = vmatpush1.bf16.xpose.msra.mxu0 0
      %491 = vmatprep.subr.bf16.mxu0 0
      %492 = vmatpush1.bf16.xpose.msra.mxu0 0
      %493 = vmatprep.subr.bf16.mxu0 0
      %494 = vmatpush1.bf16.xpose.msra.mxu0 0
      %495 = vmatprep.subr.bf16.mxu0 0
      %496 = vmatpush1.bf16.xpose.msra.mxu0 0
      %497 = vmatprep.subr.bf16.mxu0 0
      %498 = vmatpush1.bf16.xpose.msra.mxu0 0
      %499 = vmatprep.subr.bf16.mxu0 0
      %500 = vmatpush1.bf16.xpose.msra.mxu0 0
      %501 = vmatprep.mubr.bf16.mxu0 0
      %502 = vmatmul.mubr.bf16.gmra.mrb[0].mxu0 %v458
      %v503 = vpop.f32.mrb[0].mxu0
      %v504 = vadd.f32 0.0, %v503
      %v505 = vpop.f32.mrb[0].mxu0
      %v506 = vpop.f32.mrb[0].mxu0
      %v507 = vadd.f32 0.0, %v506
      %v508 = vpop.f32.mrb[0].mxu0
      %509 = vmatprep.mubr.bf16.mxu0 0
      %510 = vmatmul.mubr.bf16.gmra.mrb[0].mxu0 %v461
      %v511 = vpop.f32.mrb[0].mxu0
      %v512 = vadd.f32 0.0, %v511
      %v513 = vpop.f32.mrb[0].mxu0
      %v514 = vpop.f32.mrb[0].mxu0
      %v515 = vpop.f32.mrb[0].mxu0
      %516 = vdwg.mxu0
      %v520 = vunpack.c.l.b16 %v334
      %v521 = vunpack.c.l.b16 %v335
      %v522 = vunpack.c.l.b16 %v336
      %v523 = vpack.c.b16 %v521, %v520
      %v524 = vpack.c.b16 %v522, %v522
      %v528 = vunpack.c.l.b16 %v346
      %v529 = vunpack.c.l.b16 %v347
      %v530 = vunpack.c.l.b16 %v348
      %v531 = vpack.c.b16 %v529, %v528
      %v532 = vpack.c.b16 %v530, %v530
      %v534 = vsel %vm380, %v523, 0
      %v537 = vsel %vm380, %v524, 0
      %v540 = vsel %vm380, %v531, 0
      %v543 = vsel %vm380, %v532, 0
      %545 = vmatprep.subr.bf16.mxu0 0
      %546 = vmatpush1.bf16.xpose.msra.mxu0 %v540
      %547 = vmatprep.subr.bf16.mxu0 0
      %548 = vmatpush1.bf16.xpose.msra.mxu0 %v543
      %549 = vmatprep.subr.bf16.mxu0 0
      %550 = vmatpush1.bf16.xpose.msra.mxu0 0
      %551 = vmatprep.subr.bf16.mxu0 0
      %552 = vmatpush1.bf16.xpose.msra.mxu0 0
      %553 = vmatprep.subr.bf16.mxu0 0
      %554 = vmatpush1.bf16.xpose.msra.mxu0 0
      %555 = vmatprep.subr.bf16.mxu0 0
      %556 = vmatpush1.bf16.xpose.msra.mxu0 0
      %557 = vmatprep.subr.bf16.mxu0 0
      %558 = vmatpush1.bf16.xpose.msra.mxu0 0
      %559 = vmatprep.subr.bf16.mxu0 0
      %560 = vmatpush1.bf16.xpose.msra.mxu0 0
      %561 = vmatprep.subr.bf16.mxu0 0
      %562 = vmatpush1.bf16.xpose.msra.mxu0 0
      %563 = vmatprep.subr.bf16.mxu0 0
      %564 = vmatpush1.bf16.xpose.msra.mxu0 0
      %565 = vmatprep.subr.bf16.mxu0 0
      %566 = vmatpush1.bf16.xpose.msra.mxu0 0
      %567 = vmatprep.subr.bf16.mxu0 0
      %568 = vmatpush1.bf16.xpose.msra.mxu0 0
      %569 = vmatprep.subr.bf16.mxu0 0
      %570 = vmatpush1.bf16.xpose.msra.mxu0 0
      %571 = vmatprep.subr.bf16.mxu0 0
      %572 = vmatpush1.bf16.xpose.msra.mxu0 0
      %573 = vmatprep.subr.bf16.mxu0 0
      %574 = vmatpush1.bf16.xpose.msra.mxu0 0
      %575 = vmatprep.subr.bf16.mxu0 0
      %576 = vmatpush1.bf16.xpose.msra.mxu0 0
      %577 = vmatprep.mubr.bf16.mxu0 0
      %578 = vmatmul.mubr.bf16.gmra.mrb[0].mxu0 %v534
      %v579 = vpop.f32.mrb[0].mxu0
      %v580 = vadd.f32 0.0, %v579
      %v581 = vpop.f32.mrb[0].mxu0
      %v582 = vpop.f32.mrb[0].mxu0
      %v583 = vadd.f32 0.0, %v582
      %v584 = vpop.f32.mrb[0].mxu0
      %585 = vmatprep.mubr.bf16.mxu0 0
      %586 = vmatmul.mubr.bf16.gmra.mrb[0].mxu0 %v537
      %v587 = vpop.f32.mrb[0].mxu0
      %v588 = vadd.f32 0.0, %v587
      %v589 = vpop.f32.mrb[0].mxu0
      %v590 = vpop.f32.mrb[0].mxu0
      %v591 = vpop.f32.mrb[0].mxu0
      %592 = vdwg.mxu0
      %v596 = vunpack.c.l.b16 %v337
      %v597 = vunpack.c.l.b16 %v338
      %v598 = vunpack.c.l.b16 %v339
      %v599 = vpack.c.b16 %v597, %v596
      %v600 = vpack.c.b16 %v598, %v598
      %v604 = vunpack.c.l.b16 %v349
      %v605 = vunpack.c.l.b16 %v350
      %v606 = vunpack.c.l.b16 %v351
      %v607 = vpack.c.b16 %v605, %v604
      %v608 = vpack.c.b16 %v606, %v606
      %v610 = vsel %vm380, %v599, 0
      %v613 = vsel %vm380, %v600, 0
      %v616 = vsel %vm380, %v607, 0
      %v619 = vsel %vm380, %v608, 0
      %621 = vmatprep.subr.bf16.mxu0 0
      %622 = vmatpush1.bf16.xpose.msra.mxu0 %v616
      %623 = vmatprep.subr.bf16.mxu0 0
      %624 = vmatpush1.bf16.xpose.msra.mxu0 %v619
      %625 = vmatprep.subr.bf16.mxu0 0
      %626 = vmatpush1.bf16.xpose.msra.mxu0 0
      %627 = vmatprep.subr.bf16.mxu0 0
      %628 = vmatpush1.bf16.xpose.msra.mxu0 0
      %629 = vmatprep.subr.bf16.mxu0 0
      %630 = vmatpush1.bf16.xpose.msra.mxu0 0
      %631 = vmatprep.subr.bf16.mxu0 0
      %632 = vmatpush1.bf16.xpose.msra.mxu0 0
      %633 = vmatprep.subr.bf16.mxu0 0
      %634 = vmatpush1.bf16.xpose.msra.mxu0 0
      %635 = vmatprep.subr.bf16.mxu0 0
      %636 = vmatpush1.bf16.xpose.msra.mxu0 0
      %637 = vmatprep.subr.bf16.mxu0 0
      %638 = vmatpush1.bf16.xpose.msra.mxu0 0
      %639 = vmatprep.subr.bf16.mxu0 0
      %640 = vmatpush1.bf16.xpose.msra.mxu0 0
      %641 = vmatprep.subr.bf16.mxu0 0
      %642 = vmatpush1.bf16.xpose.msra.mxu0 0
      %643 = vmatprep.subr.bf16.mxu0 0
      %644 = vmatpush1.bf16.xpose.msra.mxu0 0
      %645 = vmatprep.subr.bf16.mxu0 0
      %646 = vmatpush1.bf16.xpose.msra.mxu0 0
      %647 = vmatprep.subr.bf16.mxu0 0
      %648 = vmatpush1.bf16.xpose.msra.mxu0 0
      %649 = vmatprep.subr.bf16.mxu0 0
      %650 = vmatpush1.bf16.xpose.msra.mxu0 0
      %651 = vmatprep.subr.bf16.mxu0 0
      %652 = vmatpush1.bf16.xpose.msra.mxu0 0
      %653 = vmatprep.mubr.bf16.mxu0 0
      %654 = vmatmul.mubr.bf16.gmra.mrb[0].mxu0 %v610
      %v655 = vpop.f32.mrb[0].mxu0
      %v656 = vadd.f32 0.0, %v655
      %v657 = vpop.f32.mrb[0].mxu0
      %v658 = vpop.f32.mrb[0].mxu0
      %v659 = vadd.f32 0.0, %v658
      %v660 = vpop.f32.mrb[0].mxu0
      %661 = vmatprep.mubr.bf16.mxu0 0
      %662 = vmatmul.mubr.bf16.gmra.mrb[0].mxu0 %v613
      %v663 = vpop.f32.mrb[0].mxu0
      %v664 = vadd.f32 0.0, %v663
      %v665 = vpop.f32.mrb[0].mxu0
      %v666 = vpop.f32.mrb[0].mxu0
      %v667 = vpop.f32.mrb[0].mxu0
      %668 = vdwg.mxu0
      %vm669 = vcmask 195584
      %v670 = vsel %vm669, %v428, -inf
      %671 = vmax.xlane.f32.xlu0 %v670
      %v672 = vpop.xlane.xlu0 %671
      %v673 = vsel %vm669, %v431, -inf
      %674 = vmax.xlane.f32.xlu0 %v673
      %v675 = vpop.xlane.xlu0 %674
      %v676 = vsel %vm669, %v436, -inf
      %677 = vmax.xlane.f32.xlu0 %v676
      %v678 = vpop.xlane.xlu0 %677
      %v679 = vsel %vm669, %v504, -inf
      %680 = vmax.xlane.f32.xlu0 %v679
      %v681 = vpop.xlane.xlu0 %680
      %v682 = vsel %vm669, %v507, -inf
      %683 = vmax.xlane.f32.xlu0 %v682
      %v684 = vpop.xlane.xlu0 %683
      %v685 = vsel %vm669, %v512, -inf
      %686 = vmax.xlane.f32.xlu0 %v685
      %v687 = vpop.xlane.xlu0 %686
      %v688 = vsel %vm669, %v580, -inf
      %689 = vmax.xlane.f32.xlu0 %v688
      %v690 = vpop.xlane.xlu0 %689
      %v691 = vsel %vm669, %v583, -inf
      %692 = vmax.xlane.f32.xlu0 %v691
      %v693 = vpop.xlane.xlu0 %692
      %v694 = vsel %vm669, %v588, -inf
      %695 = vmax.xlane.f32.xlu0 %v694
      %v696 = vpop.xlane.xlu0 %695
      %v697 = vsel %vm669, %v656, -inf
      %698 = vmax.xlane.f32.xlu0 %v697
      %v699 = vpop.xlane.xlu0 %698
      %v700 = vsel %vm669, %v659, -inf
      %701 = vmax.xlane.f32.xlu0 %v700
      %v702 = vpop.xlane.xlu0 %701
      %v703 = vsel %vm669, %v664, -inf
      %704 = vmax.xlane.f32.xlu0 %v703
      %v705 = vpop.xlane.xlu0 %704
      %v706 = vsub.f32 %v428, %v672
      %v707 = vsub.f32 %v431, %v675
      %v708 = vsub.f32 %v436, %v678
      %v709 = vsub.f32 %v504, %v681
      %v710 = vsub.f32 %v507, %v684
      %v711 = vsub.f32 %v512, %v687
      %v712 = vsub.f32 %v580, %v690
      %v713 = vsub.f32 %v583, %v693
      %v714 = vsub.f32 %v588, %v696
      %v715 = vsub.f32 %v656, %v699
      %v716 = vsub.f32 %v659, %v702
      %v717 = vsub.f32 %v664, %v705
      %v718 = vmul.f32 %v706, 1.442695
      %v719 = vpow.pop %v718
      %v720 = vmul.f32 %v707, 1.442695
      %v721 = vpow.pop %v720
      %v722 = vmul.f32 %v708, 1.442695
      %v723 = vpow.pop %v722
      %v724 = vmul.f32 %v709, 1.442695
      %v725 = vpow.pop %v724
      %v726 = vmul.f32 %v710, 1.442695
      %v727 = vpow.pop %v726
      %v728 = vmul.f32 %v711, 1.442695
      %v729 = vpow.pop %v728
      %v730 = vmul.f32 %v712, 1.442695
      %v731 = vpow.pop %v730
      %v732 = vmul.f32 %v713, 1.442695
      %v733 = vpow.pop %v732
      %v734 = vmul.f32 %v714, 1.442695
      %v735 = vpow.pop %v734
      %v736 = vmul.f32 %v715, 1.442695
      %v737 = vpow.pop %v736
      %v738 = vmul.f32 %v716, 1.442695
      %v739 = vpow.pop %v738
      %v740 = vmul.f32 %v717, 1.442695
      %v741 = vpow.pop %v740
      %v742 = vsel %vm669, %v719, 0.0
      %743 = vadd.xlane.f32.xlu0 %v742
      %v744 = vpop.xlane.xlu0 %743
      %v745 = vsel %vm669, %v721, 0.0
      %746 = vadd.xlane.f32.xlu0 %v745
      %v747 = vpop.xlane.xlu0 %746
      %v748 = vsel %vm669, %v723, 0.0
      %749 = vadd.xlane.f32.xlu0 %v748
      %v750 = vpop.xlane.xlu0 %749
      %v751 = vsel %vm669, %v725, 0.0
      %752 = vadd.xlane.f32.xlu0 %v751
      %v753 = vpop.xlane.xlu0 %752
      %v754 = vsel %vm669, %v727, 0.0
      %755 = vadd.xlane.f32.xlu0 %v754
      %v756 = vpop.xlane.xlu0 %755
      %v757 = vsel %vm669, %v729, 0.0
      %758 = vadd.xlane.f32.xlu0 %v757
      %v759 = vpop.xlane.xlu0 %758
      %v760 = vsel %vm669, %v731, 0.0
      %761 = vadd.xlane.f32.xlu0 %v760
      %v762 = vpop.xlane.xlu0 %761
      %v763 = vsel %vm669, %v733, 0.0
      %764 = vadd.xlane.f32.xlu0 %v763
      %v765 = vpop.xlane.xlu0 %764
      %v766 = vsel %vm669, %v735, 0.0
      %767 = vadd.xlane.f32.xlu0 %v766
      %v768 = vpop.xlane.xlu0 %767
      %v769 = vsel %vm669, %v737, 0.0
      %770 = vadd.xlane.f32.xlu0 %v769
      %v771 = vpop.xlane.xlu0 %770
      %v772 = vsel %vm669, %v739, 0.0
      %773 = vadd.xlane.f32.xlu0 %v772
      %v774 = vpop.xlane.xlu0 %773
      %v775 = vsel %vm669, %v741, 0.0
      %776 = vadd.xlane.f32.xlu0 %v775
      %v777 = vpop.xlane.xlu0 %776
      %v778 = vpack.c.bf16 %v721, %v719
      %v779 = vpack.c.bf16 %v723, %v723
      %v780 = vpack.c.bf16 %v727, %v725
      %v781 = vpack.c.bf16 %v729, %v729
      %v782 = vpack.c.bf16 %v733, %v731
      %v783 = vpack.c.bf16 %v735, %v735
      %v784 = vpack.c.bf16 %v739, %v737
      %v785 = vpack.c.bf16 %v741, %v741
      %v789 = vunpack.c.l.b16 %v352
      %v790 = vunpack.c.l.b16 %v353
      %v791 = vunpack.c.l.b16 %v354
      %v792 = vpack.c.b16 %v790, %v789
      %v793 = vpack.c.b16 %v791, %v791
      %v796 = vsel %vm669, %v778, 0
      %v799 = vsel %vm669, %v779, 0
      %vm801 = vcmask 1043456
      %v803 = vsel %vm801, %v793, 0
      %805 = vmatprep.subr.bf16.mxu0 0
      %806 = vmatpush1.bf16.msra.mxu0 %v792
      %807 = vmatprep.subr.bf16.mxu0 0
      %808 = vmatpush1.bf16.msra.mxu0 %v803
      %809 = vmatprep.subr.bf16.mxu0 0
      %810 = vmatpush1.bf16.msra.mxu0 0
      %811 = vmatprep.subr.bf16.mxu0 0
      %812 = vmatpush1.bf16.msra.mxu0 0
      %813 = vmatprep.subr.bf16.mxu0 0
      %814 = vmatpush1.bf16.msra.mxu0 0
      %815 = vmatprep.subr.bf16.mxu0 0
      %816 = vmatpush1.bf16.msra.mxu0 0
      %817 = vmatprep.subr.bf16.mxu0 0
      %818 = vmatpush1.bf16.msra.mxu0 0
      %819 = vmatprep.subr.bf16.mxu0 0
      %820 = vmatpush1.bf16.msra.mxu0 0
      %821 = vmatprep.subr.bf16.mxu0 0
      %822 = vmatpush1.bf16.msra.mxu0 0
      %823 = vmatprep.subr.bf16.mxu0 0
      %824 = vmatpush1.bf16.msra.mxu0 0
      %825 = vmatprep.subr.bf16.mxu0 0
      %826 = vmatpush1.bf16.msra.mxu0 0
      %827 = vmatprep.subr.bf16.mxu0 0
      %828 = vmatpush1.bf16.msra.mxu0 0
      %829 = vmatprep.subr.bf16.mxu0 0
      %830 = vmatpush1.bf16.msra.mxu0 0
      %831 = vmatprep.subr.bf16.mxu0 0
      %832 = vmatpush1.bf16.msra.mxu0 0
      %833 = vmatprep.subr.bf16.mxu0 0
      %834 = vmatpush1.bf16.msra.mxu0 0
      %835 = vmatprep.subr.bf16.mxu0 0
      %836 = vmatpush1.bf16.msra.mxu0 0
      %837 = vmatprep.mubr.bf16.mxu0 0
      %838 = vmatmul.mubr.bf16.gmra.mrb[0].mxu0 %v796
      %v839 = vpop.f32.mrb[0].mxu0
      %v840 = vadd.f32 0.0, %v839
      %v841 = vpop.f32.mrb[0].mxu0
      %v842 = vpop.f32.mrb[0].mxu0
      %v843 = vadd.f32 0.0, %v842
      %v844 = vpop.f32.mrb[0].mxu0
      %845 = vmatprep.mubr.bf16.mxu0 0
      %846 = vmatmul.mubr.bf16.gmra.mrb[0].mxu0 %v799
      %v847 = vpop.f32.mrb[0].mxu0
      %v848 = vadd.f32 0.0, %v847
      %v849 = vpop.f32.mrb[0].mxu0
      %v850 = vpop.f32.mrb[0].mxu0
      %v851 = vpop.f32.mrb[0].mxu0
      %852 = vdwg.mxu0
      %v856 = vunpack.c.l.b16 %v355
      %v857 = vunpack.c.l.b16 %v356
      %v858 = vunpack.c.l.b16 %v357
      %v859 = vpack.c.b16 %v857, %v856
      %v860 = vpack.c.b16 %v858, %v858
      %v863 = vsel %vm669, %v780, 0
      %v866 = vsel %vm669, %v781, 0
      %v869 = vsel %vm801, %v860, 0
      %871 = vmatprep.subr.bf16.mxu0 0
      %872 = vmatpush1.bf16.msra.mxu0 %v859
      %873 = vmatprep.subr.bf16.mxu0 0
      %874 = vmatpush1.bf16.msra.mxu0 %v869
      %875 = vmatprep.subr.bf16.mxu0 0
      %876 = vmatpush1.bf16.msra.mxu0 0
      %877 = vmatprep.subr.bf16.mxu0 0
      %878 = vmatpush1.bf16.msra.mxu0 0
      %879 = vmatprep.subr.bf16.mxu0 0
      %880 = vmatpush1.bf16.msra.mxu0 0
      %881 = vmatprep.subr.bf16.mxu0 0
      %882 = vmatpush1.bf16.msra.mxu0 0
      %883 = vmatprep.subr.bf16.mxu0 0
      %884 = vmatpush1.bf16.msra.mxu0 0
      %885 = vmatprep.subr.bf16.mxu0 0
      %886 = vmatpush1.bf16.msra.mxu0 0
      %887 = vmatprep.subr.bf16.mxu0 0
      %888 = vmatpush1.bf16.msra.mxu0 0
      %889 = vmatprep.subr.bf16.mxu0 0
      %890 = vmatpush1.bf16.msra.mxu0 0
      %891 = vmatprep.subr.bf16.mxu0 0
      %892 = vmatpush1.bf16.msra.mxu0 0
      %893 = vmatprep.subr.bf16.mxu0 0
      %894 = vmatpush1.bf16.msra.mxu0 0
      %895 = vmatprep.subr.bf16.mxu0 0
      %896 = vmatpush1.bf16.msra.mxu0 0
      %897 = vmatprep.subr.bf16.mxu0 0
      %898 = vmatpush1.bf16.msra.mxu0 0
      %899 = vmatprep.subr.bf16.mxu0 0
      %900 = vmatpush1.bf16.msra.mxu0 0
      %901 = vmatprep.subr.bf16.mxu0 0
      %902 = vmatpush1.bf16.msra.mxu0 0
      %903 = vmatprep.mubr.bf16.mxu0 0
      %904 = vmatmul.mubr.bf16.gmra.mrb[0].mxu0 %v863
      %v905 = vpop.f32.mrb[0].mxu0
      %v906 = vadd.f32 0.0, %v905
      %v907 = vpop.f32.mrb[0].mxu0
      %v908 = vpop.f32.mrb[0].mxu0
      %v909 = vadd.f32 0.0, %v908
      %v910 = vpop.f32.mrb[0].mxu0
      %911 = vmatprep.mubr.bf16.mxu0 0
      %912 = vmatmul.mubr.bf16.gmra.mrb[0].mxu0 %v866
      %v913 = vpop.f32.mrb[0].mxu0
      %v914 = vadd.f32 0.0, %v913
      %v915 = vpop.f32.mrb[0].mxu0
      %v916 = vpop.f32.mrb[0].mxu0
      %v917 = vpop.f32.mrb[0].mxu0
      %918 = vdwg.mxu0
      %v922 = vunpack.c.l.b16 %v358
      %v923 = vunpack.c.l.b16 %v359
      %v924 = vunpack.c.l.b16 %v360
      %v925 = vpack.c.b16 %v923, %v922
      %v926 = vpack.c.b16 %v924, %v924
      %v929 = vsel %vm669, %v782, 0
      %v932 = vsel %vm669, %v783, 0
      %v935 = vsel %vm801, %v926, 0
      %937 = vmatprep.subr.bf16.mxu0 0
      %938 = vmatpush1.bf16.msra.mxu0 %v925
      %939 = vmatprep.subr.bf16.mxu0 0
      %940 = vmatpush1.bf16.msra.mxu0 %v935
      %941 = vmatprep.subr.bf16.mxu0 0
      %942 = vmatpush1.bf16.msra.mxu0 0
      %943 = vmatprep.subr.bf16.mxu0 0
      %944 = vmatpush1.bf16.msra.mxu0 0
      %945 = vmatprep.subr.bf16.mxu0 0
      %946 = vmatpush1.bf16.msra.mxu0 0
      %947 = vmatprep.subr.bf16.mxu0 0
      %948 = vmatpush1.bf16.msra.mxu0 0
      %949 = vmatprep.subr.bf16.mxu0 0
      %950 = vmatpush1.bf16.msra.mxu0 0
      %951 = vmatprep.subr.bf16.mxu0 0
      %952 = vmatpush1.bf16.msra.mxu0 0
      %953 = vmatprep.subr.bf16.mxu0 0
      %954 = vmatpush1.bf16.msra.mxu0 0
      %955 = vmatprep.subr.bf16.mxu0 0
      %956 = vmatpush1.bf16.msra.mxu0 0
      %957 = vmatprep.subr.bf16.mxu0 0
      %958 = vmatpush1.bf16.msra.mxu0 0
      %959 = vmatprep.subr.bf16.mxu0 0
      %960 = vmatpush1.bf16.msra.mxu0 0
      %961 = vmatprep.subr.bf16.mxu0 0
      %962 = vmatpush1.bf16.msra.mxu0 0
      %963 = vmatprep.subr.bf16.mxu0 0
      %964 = vmatpush1.bf16.msra.mxu0 0
      %965 = vmatprep.subr.bf16.mxu0 0
      %966 = vmatpush1.bf16.msra.mxu0 0
      %967 = vmatprep.subr.bf16.mxu0 0
      %968 = vmatpush1.bf16.msra.mxu0 0
      %969 = vmatprep.mubr.bf16.mxu0 0
      %970 = vmatmul.mubr.bf16.gmra.mrb[0].mxu0 %v929
      %v971 = vpop.f32.mrb[0].mxu0
      %v972 = vadd.f32 0.0, %v971
      %v973 = vpop.f32.mrb[0].mxu0
      %v974 = vpop.f32.mrb[0].mxu0
      %v975 = vadd.f32 0.0, %v974
      %v976 = vpop.f32.mrb[0].mxu0
      %977 = vmatprep.mubr.bf16.mxu0 0
      %978 = vmatmul.mubr.bf16.gmra.mrb[0].mxu0 %v932
      %v979 = vpop.f32.mrb[0].mxu0
      %v980 = vadd.f32 0.0, %v979
      %v981 = vpop.f32.mrb[0].mxu0
      %v982 = vpop.f32.mrb[0].mxu0
      %v983 = vpop.f32.mrb[0].mxu0
      %984 = vdwg.mxu0
      %v988 = vunpack.c.l.b16 %v361
      %v989 = vunpack.c.l.b16 %v362
      %v990 = vunpack.c.l.b16 %v363
      %v991 = vpack.c.b16 %v989, %v988
      %v992 = vpack.c.b16 %v990, %v990
      %v995 = vsel %vm669, %v784, 0
      %v998 = vsel %vm669, %v785, 0
      %v1001 = vsel %vm801, %v992, 0
      %1003 = vmatprep.subr.bf16.mxu0 0
      %1004 = vmatpush1.bf16.msra.mxu0 %v991
      %1005 = vmatprep.subr.bf16.mxu0 0
      %1006 = vmatpush1.bf16.msra.mxu0 %v1001
      %1007 = vmatprep.subr.bf16.mxu0 0
      %1008 = vmatpush1.bf16.msra.mxu0 0
      %1009 = vmatprep.subr.bf16.mxu0 0
      %1010 = vmatpush1.bf16.msra.mxu0 0
      %1011 = vmatprep.subr.bf16.mxu0 0
      %1012 = vmatpush1.bf16.msra.mxu0 0
      %1013 = vmatprep.subr.bf16.mxu0 0
      %1014 = vmatpush1.bf16.msra.mxu0 0
      %1015 = vmatprep.subr.bf16.mxu0 0
      %1016 = vmatpush1.bf16.msra.mxu0 0
      %1017 = vmatprep.subr.bf16.mxu0 0
      %1018 = vmatpush1.bf16.msra.mxu0 0
      %1019 = vmatprep.subr.bf16.mxu0 0
      %1020 = vmatpush1.bf16.msra.mxu0 0
      %1021 = vmatprep.subr.bf16.mxu0 0
      %1022 = vmatpush1.bf16.msra.mxu0 0
      %1023 = vmatprep.subr.bf16.mxu0 0
      %1024 = vmatpush1.bf16.msra.mxu0 0
      %1025 = vmatprep.subr.bf16.mxu0 0
      %1026 = vmatpush1.bf16.msra.mxu0 0
      %1027 = vmatprep.subr.bf16.mxu0 0
      %1028 = vmatpush1.bf16.msra.mxu0 0
      %1029 = vmatprep.subr.bf16.mxu0 0
      %1030 = vmatpush1.bf16.msra.mxu0 0
      %1031 = vmatprep.subr.bf16.mxu0 0
      %1032 = vmatpush1.bf16.msra.mxu0 0
      %1033 = vmatprep.subr.bf16.mxu0 0
      %1034 = vmatpush1.bf16.msra.mxu0 0
      %1035 = vmatprep.mubr.bf16.mxu0 0
      %1036 = vmatmul.mubr.bf16.gmra.mrb[0].mxu0 %v995
      %v1037 = vpop.f32.mrb[0].mxu0
      %v1038 = vadd.f32 0.0, %v1037
      %v1039 = vpop.f32.mrb[0].mxu0
      %v1040 = vpop.f32.mrb[0].mxu0
      %v1041 = vadd.f32 0.0, %v1040
      %v1042 = vpop.f32.mrb[0].mxu0
      %1043 = vmatprep.mubr.bf16.mxu0 0
      %1044 = vmatmul.mubr.bf16.gmra.mrb[0].mxu0 %v998
      %v1045 = vpop.f32.mrb[0].mxu0
      %v1046 = vadd.f32 0.0, %v1045
      %v1047 = vpop.f32.mrb[0].mxu0
      %v1048 = vpop.f32.mrb[0].mxu0
      %v1049 = vpop.f32.mrb[0].mxu0
      %1050 = vdwg.mxu0
      %v1051 = vrcp.pop %v744
      %v1052 = vrcp.pop %v747
      %v1053 = vrcp.pop %v750
      %v1054 = vrcp.pop %v753
      %v1055 = vrcp.pop %v756
      %v1056 = vrcp.pop %v759
      %v1057 = vrcp.pop %v762
      %v1058 = vrcp.pop %v765
      %v1059 = vrcp.pop %v768
      %v1060 = vrcp.pop %v771
      %v1061 = vrcp.pop %v774
      %v1062 = vrcp.pop %v777
      %v1063 = vmul.f32 %v840, %v1051
      %v1064 = vmul.f32 %v843, %v1052
      %v1065 = vmul.f32 %v848, %v1053
      %v1066 = vmul.f32 %v906, %v1054
      %v1067 = vmul.f32 %v909, %v1055
      %v1068 = vmul.f32 %v914, %v1056
      %v1069 = vmul.f32 %v972, %v1057
      %v1070 = vmul.f32 %v975, %v1058
      %v1071 = vmul.f32 %v980, %v1059
      %v1072 = vmul.f32 %v1038, %v1060
      %v1073 = vmul.f32 %v1041, %v1061
      %v1074 = vmul.f32 %v1046, %v1062
      %1075 = vst.msk [vmem:[%s324] sm:$0xff] %vm380, %v1063
      %1076 = vst.msk [vmem:[%s324 + $0x8] sm:$0xff] %vm380, %v1064
      %1077 = vst.msk [vmem:[%s324 + $0x10] sm:$0xff] %vm380, %v1065
      %1078 = vst.msk [vmem:[%s324 + $0x18] sm:$0xff] %vm380, %v1066
      %1079 = vst.msk [vmem:[%s324 + $0x20] sm:$0xff] %vm380, %v1067
      %1080 = vst.msk [vmem:[%s324 + $0x28] sm:$0xff] %vm380, %v1068
      %1081 = vst.msk [vmem:[%s324 + $0x30] sm:$0xff] %vm380, %v1069
      %1082 = vst.msk [vmem:[%s324 + $0x38] sm:$0xff] %vm380, %v1070
      %1083 = vst.msk [vmem:[%s324 + $0x40] sm:$0xff] %vm380, %v1071
      %1084 = vst.msk [vmem:[%s324 + $0x48] sm:$0xff] %vm380, %v1072
      %1085 = vst.msk [vmem:[%s324 + $0x50] sm:$0xff] %vm380, %v1073
      %1086 = vst.msk [vmem:[%s324 + $0x58] sm:$0xff] %vm380, %v1074
      %s1087 = smul.u32 4, %s20
      %s1088 = smul.u32 3, %s21
      %p1089 = scmp.lt.s32.totalorder %s19, 1
      %s1090 = scalar_select %p1089, %s19, 1
      %p1091 = scmp.lt.s32.totalorder %s1087, 3
      %s1092 = scalar_select %p1091, %s1087, 3
      %p1093 = scmp.lt.s32.totalorder %s1088, 2
      %s1094 = scalar_select %p1093, %s1088, 2
      %s1095 = smul.addr %s1092, 3
      %s1096 = sadd.s32 %s1094, %s1095
      %s1097 = smul.addr %s1090, 12
      %s1098 = sadd.s32 %s1096, %s1097
      %s1099 = smul.addr %s1098, 8
      %s1100 = scalar_lea.vmem %s3, %s1099
      // Predicated region
      $region33: #{closed_call.16} parent=31 // pred_check
        %p1101 = pneg %p141
      $region34: #{closed_call.16} parent=31 // pred_check_branch
        %1103 = sbr.rel (%p1101) target = $region36
      $region35: #{closed_call.16} parent=31 // pred_region
        %s1104 = smul.u32 4, %s20
        %s1105 = smul.u32 3, %s21
      $region36: #{closed_call.16} parent=31 // pred_fallthru
        _
    $region32: #{closed_call.16} parent=5 // pred_fallthru
      _
    %p1106 = scmp.le.s32.totalorder 2, %s9
    // Predicated region
    $region37: #{closed_call.16} parent=5 // pred_check
      %p1107 = pneg %p1106
    $region38: #{closed_call.16} parent=5 // pred_check_branch
      %1109 = sbr.rel (%p1107) target = $region40
    $region39: #{closed_call.16} parent=5 // pred_region
      %s1110 = ssub.s32 %s9, 2
      // Predicated region
      $region41: #{closed_call.16} parent=39 // pred_check
        %p1111 = pneg %p147
      $region42: #{closed_call.16} parent=39 // pred_check_branch
        %1113 = sbr.rel (%p1111) target = $region44
      $region43: #{closed_call.16} parent=39 // pred_region
        %s1114 = smul.u32 4, %s23
        %s1115 = smul.u32 3, %s24
        %p1116 = scmp.lt.s32.totalorder %s22, 1
        %s1117 = scalar_select %p1116, %s22, 1
        %p1118 = scmp.lt.s32.totalorder %s1114, 3
        %s1119 = scalar_select %p1118, %s1114, 3
        %p1120 = scmp.lt.s32.totalorder %s1115, 2
        %s1121 = scalar_select %p1120, %s1115, 2
        %s1122 = smul.addr %s1119, 3
        %s1123 = sadd.s32 %s1121, %s1122
        %s1124 = smul.addr %s1117, 12
        %s1125 = sadd.s32 %s1123, %s1124
        %s1126 = smul.addr %s1125, 8
        %s1127 = scalar_lea.vmem %s3, %s1126
      $region44: #{closed_call.16} parent=39 // pred_fallthru
        _
    $region40: #{closed_call.16} parent=5 // pred_fallthru
      _
  $region6: #{closed_call.16} parent=0 // loop_footer
    %s13 = sadd.s32 1, %s9
  $region7: #{closed_call.16} parent=0 // loop_footer_branch
    %8 = sbr.rel target = $region3
  $region8: #{closed_call.16} parent=0 // loop_exit
    _

// kernel: closed_call.17
$region0: #{closed_call.17}
  #allocation0 [shape = 'u32[]', space=smem, size = 0x4, offset = 0x4, fixed_abs, tag = 'smem constant byte address 0x4 - core index']
  #allocation1 [shape = 'u32[144,128]{1,0:T(1,128)}', space=vmem, size = 0x12000, scoped, tag = 'internal scratch']
  %s0 = inlined_call_operand.vmem [shape: bf16[2,1,24,32], index: 0, kind: input, shape index: {}]
  %s1 = inlined_call_operand.vmem [shape: bf16[2,1,24,32], index: 1, kind: input, shape index: {}]
  %s2 = inlined_call_operand.vmem [shape: bf16[2,1,24,32], index: 2, kind: input, shape index: {}]
  %s3 = inlined_call_operand.vmem [shape: f32[2,1,24,32], index: 3, kind: output, shape index: {}]
  %s4 = sld [smem:[#allocation0]]
  $region45: #{closed_call.17} parent=0
    _
  %s6 = ssub.s32 1, %s4
  %s7 = scalar_select 0, %s6, %s4
  loop: start=0, step=1, limit=4
  $region2: #{closed_call.17} parent=0 // loop_pre_header
    _
  $region3: #{closed_call.17} parent=0 // loop_header
    %s9 = sphi 0, %s13
    %p10 = scmp.ge.s32.totalorder %s9, 4
    %s16 = sphi 0, %s35
    %s17 = sphi 0, %s31
    %s18 = sphi 0, %s27
    %s19 = sphi 0, %s16
    %s20 = sphi 0, %s17
    %s21 = sphi 0, %s18
    %s22 = sphi 0, %s19
    %s23 = sphi 0, %s20
    %s24 = sphi 0, %s21
    %s42 = sphi 0, %s44
    %s45 = sphi 0, %s42
    %s46 = sphi 0, %s45
    %s62 = sphi 0, %s46
    %s70 = sphi 0, %s72
    %s73 = sphi 0, %s70
    %s74 = sphi 0, %s73
    %s90 = sphi 0, %s74
    %s98 = sphi 0, %s100
    %s101 = sphi 0, %s98
    %s102 = sphi 0, %s101
    %s118 = sphi 0, %s102
    %s128 = sphi 0, %s130
    %s131 = sphi 0, %s128
    %s132 = sphi 0, %s131
    %s148 = sphi 0, %s132
  $region4: #{closed_call.17} parent=0 // loop_header_branch
    %12 = sbr.rel (%p10) target = $region8
  $region5: #{closed_call.17} parent=0 // loop_body
    %s14 = ssub.s32 %s9, 1
    %s15 = ssub.s32 %s9, 2
    %s25 = sadd.s32 1, %s18
    %p26 = scmp.ge.s32.totalorder %s25, 1
    %s27 = scalar_select %p26, 0, %s25
    %s28 = sadd.s32 1, %s17
    %s29 = scalar_select %p26, %s28, %s17
    %p30 = scmp.ge.s32.totalorder %s29, 1
    %s31 = scalar_select %p30, 0, %s29
    %s32 = sadd.s32 1, %s16
    %s33 = scalar_select %p30, %s32, %s16
    %p34 = scmp.ge.s32.totalorder %s33, 2
    %s35 = scalar_select %p34, 0, %s33
    %s36 = ssub.s32 %s16, %s35
    %s37 = ssub.s32 %s17, %s31
    %s38 = sor.u32 %s36, %s37
    %s39 = ssub.s32 %s18, %s27
    %s40 = sor.u32 %s38, %s39
    %p41 = scmp.eq.s32.totalorder %s40, 0
    %s43 = sadd.s32 %s42, 1
    %s44 = scalar_select %p41, %s42, %s43
    %p47 = pneg %p41
    %p48 = scmp.eq.s32.totalorder %s9, 1
    %p49 = por %p47, %p48
    %p50 = scmp.ne.s32.totalorder %s42, %s45
    %p51 = scmp.eq.s32.totalorder %s9, 0
    %p52 = por %p50, %p51
    %p53 = scmp.ne.s32.totalorder %s42, %s45
    %p54 = scmp.eq.s32.totalorder %s14, 1
    %p55 = por %p53, %p54
    %p56 = scmp.ne.s32.totalorder %s45, %s46
    %p57 = scmp.eq.s32.totalorder %s14, 0
    %p58 = por %p56, %p57
    %p59 = scmp.ne.s32.totalorder %s45, %s46
    %p60 = scmp.eq.s32.totalorder %s15, 1
    %p61 = por %p59, %p60
    %p63 = scmp.ne.s32.totalorder %s46, %s62
    %p64 = scmp.eq.s32.totalorder %s15, 0
    %p65 = por %p63, %p64
    %s66 = ssub.s32 %s16, %s35
    %s67 = ssub.s32 %s17, %s31
    %s68 = sor.u32 %s66, %s67
    %p69 = scmp.eq.s32.totalorder %s68, 0
    %s71 = sadd.s32 %s70, 1
    %s72 = scalar_select %p69, %s70, %s71
    %p75 = pneg %p69
    %p76 = scmp.eq.s32.totalorder %s9, 1
    %p77 = por %p75, %p76
    %p78 = scmp.ne.s32.totalorder %s70, %s73
    %p79 = scmp.eq.s32.totalorder %s9, 0
    %p80 = por %p78, %p79
    %p81 = scmp.ne.s32.totalorder %s70, %s73
    %p82 = scmp.eq.s32.totalorder %s14, 1
    %p83 = por %p81, %p82
    %p84 = scmp.ne.s32.totalorder %s73, %s74
    %p85 = scmp.eq.s32.totalorder %s14, 0
    %p86 = por %p84, %p85
    %p87 = scmp.ne.s32.totalorder %s73, %s74
    %p88 = scmp.eq.s32.totalorder %s15, 1
    %p89 = por %p87, %p88
    %p91 = scmp.ne.s32.totalorder %s74, %s90
    %p92 = scmp.eq.s32.totalorder %s15, 0
    %p93 = por %p91, %p92
    %s94 = ssub.s32 %s16, %s35
    %s95 = ssub.s32 %s17, %s31
    %s96 = sor.u32 %s94, %s95
    %p97 = scmp.eq.s32.totalorder %s96, 0
    %s99 = sadd.s32 %s98, 1
    %s100 = scalar_select %p97, %s98, %s99
    %p103 = pneg %p97
    %p104 = scmp.eq.s32.totalorder %s9, 1
    %p105 = por %p103, %p104
    %p106 = scmp.ne.s32.totalorder %s98, %s101
    %p107 = scmp.eq.s32.totalorder %s9, 0
    %p108 = por %p106, %p107
    %p109 = scmp.ne.s32.totalorder %s98, %s101
    %p110 = scmp.eq.s32.totalorder %s14, 1
    %p111 = por %p109, %p110
    %p112 = scmp.ne.s32.totalorder %s101, %s102
    %p113 = scmp.eq.s32.totalorder %s14, 0
    %p114 = por %p112, %p113
    %p115 = scmp.ne.s32.totalorder %s101, %s102
    %p116 = scmp.eq.s32.totalorder %s15, 1
    %p117 = por %p115, %p116
    %p119 = scmp.ne.s32.totalorder %s102, %s118
    %p120 = scmp.eq.s32.totalorder %s15, 0
    %p121 = por %p119, %p120
    %s122 = ssub.s32 %s16, %s35
    %s123 = ssub.s32 %s17, %s31
    %s124 = sor.u32 %s122, %s123
    %s125 = ssub.s32 %s18, %s27
    %s126 = sor.u32 %s124, %s125
    %p127 = scmp.eq.s32.totalorder %s126, 0
    %s129 = sadd.s32 %s128, 1
    %s130 = scalar_select %p127, %s128, %s129
    %p133 = pneg %p127
    %p134 = scmp.eq.s32.totalorder %s9, 1
    %p135 = por %p133, %p134
    %p136 = scmp.ne.s32.totalorder %s128, %s131
    %p137 = scmp.eq.s32.totalorder %s9, 0
    %p138 = por %p136, %p137
    %p139 = scmp.ne.s32.totalorder %s128, %s131
    %p140 = scmp.eq.s32.totalorder %s14, 1
    %p141 = por %p139, %p140
    %p142 = scmp.ne.s32.totalorder %s131, %s132
    %p143 = scmp.eq.s32.totalorder %s14, 0
    %p144 = por %p142, %p143
    %p145 = scmp.ne.s32.totalorder %s131, %s132
    %p146 = scmp.eq.s32.totalorder %s15, 1
    %p147 = por %p145, %p146
    %p149 = scmp.ne.s32.totalorder %s132, %s148
    %p150 = scmp.eq.s32.totalorder %s15, 0
    %p151 = por %p149, %p150
    %p152 = scmp.le.s32.totalorder 1, %s9
    %p153 = scmp.lt.s32.totalorder %s9, 3
    %p154 = pnand %p152, %p153
    %p155 = pneg %p154
    // Predicated region
    $region9: #{closed_call.17} parent=5 // pred_check
      _
    $region10: #{closed_call.17} parent=5 // pred_check_branch
      %157 = sbr.rel (%p154) target = $region12
    $region11: #{closed_call.17} parent=5 // pred_region
      %s158 = ssub.s32 %s9, 1
    $region12: #{closed_call.17} parent=5 // pred_fallthru
      _
    %p159 = scmp.lt.s32.totalorder %s9, 2
    // Predicated region
    $region13: #{closed_call.17} parent=5 // pred_check
      %p160 = pneg %p159
    $region14: #{closed_call.17} parent=5 // pred_check_branch
      %162 = sbr.rel (%p160) target = $region16
    $region15: #{closed_call.17} parent=5 // pred_region
      // Predicated region
      $region17: #{closed_call.17} parent=15 // pred_check
        %p163 = pneg %p52
      $region18: #{closed_call.17} parent=15 // pred_check_branch
        %165 = sbr.rel (%p163) target = $region20
      $region19: #{closed_call.17} parent=15 // pred_region
        %s166 = smul.u32 3, %s18
        %p167 = scmp.lt.s32.totalorder %s16, 1
        %s168 = scalar_select %p167, %s16, 1
        %p169 = scmp.lt.s32.totalorder %s17, 0
        %s170 = scalar_select %p169, %s17, 0
        %p171 = scmp.lt.s32.totalorder %s166, 2
        %s172 = scalar_select %p171, %s166, 2
        %s173 = smul.addr %s170, 3
        %s174 = sadd.s32 %s172, %s173
        %s175 = smul.addr %s168, 3
        %s176 = sadd.s32 %s174, %s175
        %s177 = smul.addr %s176, 4
        %s178 = scalar_lea.vmem %s0, %s177
        %s179 = smul.u32 3, %s18
      $region20: #{closed_call.17} parent=15 // pred_fallthru
        _
      // Predicated region
      $region21: #{closed_call.17} parent=15 // pred_check
        %p180 = pneg %p80
      $region22: #{closed_call.17} parent=15 // pred_check_branch
        %182 = sbr.rel (%p180) target = $region24
      $region23: #{closed_call.17} parent=15 // pred_region
        %p183 = scmp.lt.s32.totalorder %s16, 1
        %s184 = scalar_select %p183, %s16, 1
        %p185 = scmp.lt.s32.totalorder %s17, 0
        %s186 = scalar_select %p185, %s17, 0
        %s187 = smul.addr %s186, 3
        %s188 = smul.addr %s184, 3
        %s189 = sadd.s32 %s187, %s188
        %s190 = smul.addr %s189, 4
        %s191 = scalar_lea.vmem %s1, %s190
      $region24: #{closed_call.17} parent=15 // pred_fallthru
        _
      // Predicated region
      $region25: #{closed_call.17} parent=15 // pred_check
        %p192 = pneg %p108
      $region26: #{closed_call.17} parent=15 // pred_check_branch
        %194 = sbr.rel (%p192) target = $region28
      $region27: #{closed_call.17} parent=15 // pred_region
        %p195 = scmp.lt.s32.totalorder %s16, 1
        %s196 = scalar_select %p195, %s16, 1
        %p197 = scmp.lt.s32.totalorder %s17, 0
        %s198 = scalar_select %p197, %s17, 0
        %s199 = smul.addr %s198, 3
        %s200 = smul.addr %s196, 3
        %s201 = sadd.s32 %s199, %s200
        %s202 = smul.addr %s201, 4
        %s203 = scalar_lea.vmem %s2, %s202
      $region28: #{closed_call.17} parent=15 // pred_fallthru
        _
    $region16: #{closed_call.17} parent=5 // pred_fallthru
      _
    %p204 = scmp.le.s32.totalorder 1, %s9
    %p205 = scmp.lt.s32.totalorder %s9, 3
    %p206 = pnand %p204, %p205
    %p207 = pneg %p206
    // Predicated region
    $region29: #{closed_call.17} parent=5 // pred_check
      _
    $region30: #{closed_call.17} parent=5 // pred_check_branch
      %209 = sbr.rel (%p206) target = $region32
    $region31: #{closed_call.17} parent=5 // pred_region
      %s210 = ssub.s32 %s9, 1
      %s211 = smul.u32 3, %s21
      %p212 = scmp.lt.s32.totalorder %s19, 1
      %s213 = scalar_select %p212, %s19, 1
      %p214 = scmp.lt.s32.totalorder %s20, 0
      %s215 = scalar_select %p214, %s20, 0
      %p216 = scmp.lt.s32.totalorder %s211, 2
      %s217 = scalar_select %p216, %s211, 2
      %s218 = smul.addr %s215, 3
      %s219 = sadd.s32 %s217, %s218
      %s220 = smul.addr %s213, 3
      %s221 = sadd.s32 %s219, %s220
      %s222 = smul.addr %s221, 4
      %s223 = scalar_lea.vmem %s0, %s222
      %p224 = pneg %p58
      %p225 = pneg %p55
      %p226 = scmp.lt.s32.totalorder %s19, 1
      %s227 = scalar_select %p226, %s19, 1
      %p228 = scmp.lt.s32.totalorder %s20, 0
      %s229 = scalar_select %p228, %s20, 0
      %s230 = smul.addr %s229, 3
      %s231 = smul.addr %s227, 3
      %s232 = sadd.s32 %s230, %s231
      %s233 = smul.addr %s232, 4
      %s234 = scalar_lea.vmem %s1, %s233
      %p235 = pneg %p86
      %p236 = pneg %p83
      %p237 = scmp.lt.s32.totalorder %s19, 1
      %s238 = scalar_select %p237, %s19, 1
      %p239 = scmp.lt.s32.totalorder %s20, 0
      %s240 = scalar_select %p239, %s20, 0
      %s241 = smul.addr %s240, 3
      %s242 = smul.addr %s238, 3
      %s243 = sadd.s32 %s241, %s242
      %s244 = smul.addr %s243, 4
      %s245 = scalar_lea.vmem %s2, %s244
      %p246 = pneg %p114
      %p247 = pneg %p111
      %p248 = pneg %p144
      %p249 = pneg %p141
      %s250 = smul.u32 3, %s21
      %p251 = scmp.lt.s32.totalorder %s19, 1
      %s252 = scalar_select %p251, %s19, 1
      %p253 = scmp.lt.s32.totalorder %s20, 0
      %s254 = scalar_select %p253, %s20, 0
      %p255 = scmp.lt.s32.totalorder %s250, 2
      %s256 = scalar_select %p255, %s250, 2
      %s257 = smul.addr %s254, 3
      %s258 = sadd.s32 %s256, %s257
      %s259 = smul.addr %s252, 3
      %s260 = sadd.s32 %s258, %s259
      %s261 = smul.addr %s260, 8
      %s262 = scalar_lea.vmem %s3, %s261
      %s263 = smul.u32 3, %s21
      %p264 = scmp.lt.s32.totalorder %s19, 1
      %s265 = scalar_select %p264, %s19, 1
      %p266 = scmp.lt.s32.totalorder %s20, 0
      %s267 = scalar_select %p266, %s20, 0
      %p268 = scmp.lt.s32.totalorder %s263, 2
      %s269 = scalar_select %p268, %s263, 2
      %s270 = smul.addr %s267, 3
      %s271 = sadd.s32 %s269, %s270
      %s272 = smul.addr %s265, 3
      %s273 = sadd.s32 %s271, %s272
      %s274 = smul.addr %s273, 4
      %s275 = scalar_lea.vmem %s0, %s274
      %s276 = smul.u32 3, %s21
      %p277 = scmp.lt.s32.totalorder %s19, 1
      %s278 = scalar_select %p277, %s19, 1
      %p279 = scmp.lt.s32.totalorder %s20, 0
      %s280 = scalar_select %p279, %s20, 0
      %s281 = smul.addr %s280, 3
      %s282 = smul.addr %s278, 3
      %s283 = sadd.s32 %s281, %s282
      %s284 = smul.addr %s283, 4
      %s285 = scalar_lea.vmem %s1, %s284
      %p286 = scmp.lt.s32.totalorder %s19, 1
      %s287 = scalar_select %p286, %s19, 1
      %p288 = scmp.lt.s32.totalorder %s20, 0
      %s289 = scalar_select %p288, %s20, 0
      %s290 = smul.addr %s289, 3
      %s291 = smul.addr %s287, 3
      %s292 = sadd.s32 %s290, %s291
      %s293 = smul.addr %s292, 4
      %s294 = scalar_lea.vmem %s2, %s293
      %s295 = smul.u32 3, %s21
      %p296 = scmp.lt.s32.totalorder %s19, 1
      %s297 = scalar_select %p296, %s19, 1
      %p298 = scmp.lt.s32.totalorder %s20, 0
      %s299 = scalar_select %p298, %s20, 0
      %p300 = scmp.lt.s32.totalorder %s295, 2
      %s301 = scalar_select %p300, %s295, 2
      %s302 = smul.addr %s299, 3
      %s303 = sadd.s32 %s301, %s302
      %s304 = smul.addr %s297, 3
      %s305 = sadd.s32 %s303, %s304
      %s306 = smul.addr %s305, 8
      %s307 = scalar_lea.vmem %s3, %s306
      %s308 = smul.u32 3, %s21
      %v310 = vld [vmem:[%s275] sm:$0xf]
      %v311 = vld [vmem:[%s275 + $0x4] sm:$0xf]
      %v312 = vld [vmem:[%s275 + $0x8] sm:$0xf]
      %v313 = vld [vmem:[%s285] sm:$0xf]
      %v314 = vld [vmem:[%s285 + $0x4] sm:$0xf]
      %v315 = vld [vmem:[%s285 + $0x8] sm:$0xf]
      %v316 = vld [vmem:[%s294] sm:$0xf]
      %v317 = vld [vmem:[%s294 + $0x4] sm:$0xf]
      %v318 = vld [vmem:[%s294 + $0x8] sm:$0xf]
      %v322 = vunpack.c.l.b16 %v310
      %v323 = vunpack.c.l.b16 %v311
      %v324 = vunpack.c.l.b16 %v312
      %v325 = vpack.c.b16 %v323, %v322
      %v326 = vpack.c.b16 %v324, %v324
      %v330 = vunpack.c.l.b16 %v313
      %v331 = vunpack.c.l.b16 %v314
      %v332 = vunpack.c.l.b16 %v315
      %v333 = vpack.c.b16 %v331, %v330
      %v334 = vpack.c.b16 %v332, %v332
      %vm335 = vcmask 261120
      %v337 = vsel %vm335, %v325, 0
      %v340 = vsel %vm335, %v326, 0
      %v343 = vsel %vm335, %v333, 0
      %v346 = vsel %vm335, %v334, 0
      %348 = vmatprep.subr.bf16.mxu0 0
      %349 = vmatpush1.bf16.xpose.msra.mxu0 %v343
      %350 = vmatprep.subr.bf16.mxu0 0
      %351 = vmatpush1.bf16.xpose.msra.mxu0 %v346
      %352 = vmatprep.subr.bf16.mxu0 0
      %353 = vmatpush1.bf16.xpose.msra.mxu0 0
      %354 = vmatprep.subr.bf16.mxu0 0
      %355 = vmatpush1.bf16.xpose.msra.mxu0 0
      %356 = vmatprep.subr.bf16.mxu0 0
      %357 = vmatpush1.bf16.xpose.msra.mxu0 0
      %358 = vmatprep.subr.bf16.mxu0 0
      %359 = vmatpush1.bf16.xpose.msra.mxu0 0
      %360 = vmatprep.subr.bf16.mxu0 0
      %361 = vmatpush1.bf16.xpose.msra.mxu0 0
      %362 = vmatprep.subr.bf16.mxu0 0
      %363 = vmatpush1.bf16.xpose.msra.mxu0 0
      %364 = vmatprep.subr.bf16.mxu0 0
      %365 = vmatpush1.bf16.xpose.msra.mxu0 0
      %366 = vmatprep.subr.bf16.mxu0 0
      %367 = vmatpush1.bf16.xpose.msra.mxu0 0
      %368 = vmatprep.subr.bf16.mxu0 0
      %369 = vmatpush1.bf16.xpose.msra.mxu0 0
      %370 = vmatprep.subr.bf16.mxu0 0
      %371 = vmatpush1.bf16.xpose.msra.mxu0 0
      %372 = vmatprep.subr.bf16.mxu0 0
      %373 = vmatpush1.bf16.xpose.msra.mxu0 0
      %374 = vmatprep.subr.bf16.mxu0 0
      %375 = vmatpush1.bf16.xpose.msra.mxu0 0
      %376 = vmatprep.subr.bf16.mxu0 0
      %377 = vmatpush1.bf16.xpose.msra.mxu0 0
      %378 = vmatprep.subr.bf16.mxu0 0
      %379 = vmatpush1.bf16.xpose.msra.mxu0 0
      %380 = vmatprep.mubr.bf16.mxu0 0
      %381 = vmatmul.mubr.bf16.gmra.mrb[0].mxu0 %v337
      %v382 = vpop.f32.mrb[0].mxu0
      %v383 = vadd.f32 0.0, %v382
      %v384 = vpop.f32.mrb[0].mxu0
      %v385 = vpop.f32.mrb[0].mxu0
      %v386 = vadd.f32 0.0, %v385
      %v387 = vpop.f32.mrb[0].mxu0
      %388 = vmatprep.mubr.bf16.mxu0 0
      %389 = vmatmul.mubr.bf16.gmra.mrb[0].mxu0 %v340
      %v390 = vpop.f32.mrb[0].mxu0
      %v391 = vadd.f32 0.0, %v390
      %v392 = vpop.f32.mrb[0].mxu0
      %v393 = vpop.f32.mrb[0].mxu0
      %v394 = vpop.f32.mrb[0].mxu0
      %395 = vdwg.mxu0
      %vm396 = vcmask 195584
      %v397 = vsel %vm396, %v383, -inf
      %398 = vmax.xlane.f32.xlu0 %v397
      %v399 = vpop.xlane.xlu0 %398
      %v400 = vsel %vm396, %v386, -inf
      %401 = vmax.xlane.f32.xlu0 %v400
      %v402 = vpop.xlane.xlu0 %401
      %v403 = vsel %vm396, %v391, -inf
      %404 = vmax.xlane.f32.xlu0 %v403
      %v405 = vpop.xlane.xlu0 %404
      %v406 = vsub.f32 %v383, %v399
      %v407 = vsub.f32 %v386, %v402
      %v408 = vsub.f32 %v391, %v405
      %v409 = vmul.f32 %v406, 1.442695
      %v410 = vpow.pop %v409
      %v411 = vmul.f32 %v407, 1.442695
      %v412 = vpow.pop %v411
      %v413 = vmul.f32 %v408, 1.442695
      %v414 = vpow.pop %v413
      %v415 = vsel %vm396, %v410, 0.0
      %416 = vadd.xlane.f32.xlu0 %v415
      %v417 = vpop.xlane.xlu0 %416
      %v418 = vsel %vm396, %v412, 0.0
      %419 = vadd.xlane.f32.xlu0 %v418
      %v420 = vpop.xlane.xlu0 %419
      %v421 = vsel %vm396, %v414, 0.0
      %422 = vadd.xlane.f32.xlu0 %v421
      %v423 = vpop.xlane.xlu0 %422
      %v424 = vpack.c.bf16 %v412, %v410
      %v425 = vpack.c.bf16 %v414, %v414
      %v429 = vunpack.c.l.b16 %v316
      %v430 = vunpack.c.l.b16 %v317
      %v431 = vunpack.c.l.b16 %v318
      %v432 = vpack.c.b16 %v430, %v429
      %v433 = vpack.c.b16 %v431, %v431
      %v436 = vsel %vm396, %v424, 0
      %v439 = vsel %vm396, %v425, 0
      %vm441 = vcmask 1043456
      %v443 = vsel %vm441, %v433, 0
      %445 = vmatprep.subr.bf16.mxu0 0
      %446 = vmatpush1.bf16.msra.mxu0 %v432
      %447 = vmatprep.subr.bf16.mxu0 0
      %448 = vmatpush1.bf16.msra.mxu0 %v443
      %449 = vmatprep.subr.bf16.mxu0 0
      %450 = vmatpush1.bf16.msra.mxu0 0
      %451 = vmatprep.subr.bf16.mxu0 0
      %452 = vmatpush1.bf16.msra.mxu0 0
      %453 = vmatprep.subr.bf16.mxu0 0
      %454 = vmatpush1.bf16.msra.mxu0 0
      %455 = vmatprep.subr.bf16.mxu0 0
      %456 = vmatpush1.bf16.msra.mxu0 0
      %457 = vmatprep.subr.bf16.mxu0 0
      %458 = vmatpush1.bf16.msra.mxu0 0
      %459 = vmatprep.subr.bf16.mxu0 0
      %460 = vmatpush1.bf16.msra.mxu0 0
      %461 = vmatprep.subr.bf16.mxu0 0
      %462 = vmatpush1.bf16.msra.mxu0 0
      %463 = vmatprep.subr.bf16.mxu0 0
      %464 = vmatpush1.bf16.msra.mxu0 0
      %465 = vmatprep.subr.bf16.mxu0 0
      %466 = vmatpush1.bf16.msra.mxu0 0
      %467 = vmatprep.subr.bf16.mxu0 0
      %468 = vmatpush1.bf16.msra.mxu0 0
      %469 = vmatprep.subr.bf16.mxu0 0
      %470 = vmatpush1.bf16.msra.mxu0 0
      %471 = vmatprep.subr.bf16.mxu0 0
      %472 = vmatpush1.bf16.msra.mxu0 0
      %473 = vmatprep.subr.bf16.mxu0 0
      %474 = vmatpush1.bf16.msra.mxu0 0
      %475 = vmatprep.subr.bf16.mxu0 0
      %476 = vmatpush1.bf16.msra.mxu0 0
      %477 = vmatprep.mubr.bf16.mxu0 0
      %478 = vmatmul.mubr.bf16.gmra.mrb[0].mxu0 %v436
      %v479 = vpop.f32.mrb[0].mxu0
      %v480 = vadd.f32 0.0, %v479
      %v481 = vpop.f32.mrb[0].mxu0
      %v482 = vpop.f32.mrb[0].mxu0
      %v483 = vadd.f32 0.0, %v482
      %v484 = vpop.f32.mrb[0].mxu0
      %485 = vmatprep.mubr.bf16.mxu0 0
      %486 = vmatmul.mubr.bf16.gmra.mrb[0].mxu0 %v439
      %v487 = vpop.f32.mrb[0].mxu0
      %v488 = vadd.f32 0.0, %v487
      %v489 = vpop.f32.mrb[0].mxu0
      %v490 = vpop.f32.mrb[0].mxu0
      %v491 = vpop.f32.mrb[0].mxu0
      %492 = vdwg.mxu0
      %v493 = vrcp.pop %v417
      %v494 = vrcp.pop %v420
      %v495 = vrcp.pop %v423
      %v496 = vmul.f32 %v480, %v493
      %v497 = vmul.f32 %v483, %v494
      %v498 = vmul.f32 %v488, %v495
      %499 = vst.msk [vmem:[%s307] sm:$0xff] %vm335, %v496
      %500 = vst.msk [vmem:[%s307 + $0x8] sm:$0xff] %vm335, %v497
      %501 = vst.msk [vmem:[%s307 + $0x10] sm:$0xff] %vm335, %v498
      %s502 = smul.u32 3, %s21
      %p503 = scmp.lt.s32.totalorder %s19, 1
      %s504 = scalar_select %p503, %s19, 1
      %p505 = scmp.lt.s32.totalorder %s20, 0
      %s506 = scalar_select %p505, %s20, 0
      %p507 = scmp.lt.s32.totalorder %s502, 2
      %s508 = scalar_select %p507, %s502, 2
      %s509 = smul.addr %s506, 3
      %s510 = sadd.s32 %s508, %s509
      %s511 = smul.addr %s504, 3
      %s512 = sadd.s32 %s510, %s511
      %s513 = smul.addr %s512, 8
      %s514 = scalar_lea.vmem %s3, %s513
      // Predicated region
      $region33: #{closed_call.17} parent=31 // pred_check
        %p515 = pneg %p141
      $region34: #{closed_call.17} parent=31 // pred_check_branch
        %517 = sbr.rel (%p515) target = $region36
      $region35: #{closed_call.17} parent=31 // pred_region
        %s518 = smul.u32 3, %s21
      $region36: #{closed_call.17} parent=31 // pred_fallthru
        _
    $region32: #{closed_call.17} parent=5 // pred_fallthru
      _
    %p519 = scmp.le.s32.totalorder 2, %s9
    // Predicated region
    $region37: #{closed_call.17} parent=5 // pred_check
      %p520 = pneg %p519
    $region38: #{closed_call.17} parent=5 // pred_check_branch
      %522 = sbr.rel (%p520) target = $region40
    $region39: #{closed_call.17} parent=5 // pred_region
      %s523 = ssub.s32 %s9, 2
      // Predicated region
      $region41: #{closed_call.17} parent=39 // pred_check
        %p524 = pneg %p147
      $region42: #{closed_call.17} parent=39 // pred_check_branch
        %526 = sbr.rel (%p524) target = $region44
      $region43: #{closed_call.17} parent=39 // pred_region
        %s527 = smul.u32 3, %s24
        %p528 = scmp.lt.s32.totalorder %s22, 1
        %s529 = scalar_select %p528, %s22, 1
        %p530 = scmp.lt.s32.totalorder %s23, 0
        %s531 = scalar_select %p530, %s23, 0
        %p532 = scmp.lt.s32.totalorder %s527, 2
        %s533 = scalar_select %p532, %s527, 2
        %s534 = smul.addr %s531, 3
        %s535 = sadd.s32 %s533, %s534
        %s536 = smul.addr %s529, 3
        %s537 = sadd.s32 %s535, %s536
        %s538 = smul.addr %s537, 8
        %s539 = scalar_lea.vmem %s3, %s538
      $region44: #{closed_call.17} parent=39 // pred_fallthru
        _
    $region40: #{closed_call.17} parent=5 // pred_fallthru
      _
  $region6: #{closed_call.17} parent=0 // loop_footer
    %s13 = sadd.s32 1, %s9
  $region7: #{closed_call.17} parent=0 // loop_footer_branch
    %8 = sbr.rel target = $region3
  $region8: #{closed_call.17} parent=0 // loop_exit
    _

</llo_original>
